<compile_context>
chip_gen: v6e
topology: v6e:2x2x1
jax: 0.10.0
libtpu: 0.0.40
codegen_flags: <defaults>
</compile_context>

<pallas_src>
import functools
import numpy as np
import jax
import jax.numpy as jnp
from jax import lax
from jax.experimental import pallas as pl
from jax.experimental.pallas import tpu as pltpu


def _fism_loss_kernel(mh_ref, pu_ref, emb_ref, side_ref, part_ref,
                      *, bata, lamda, alpha):
    # Zero this parallel slice's accumulator on its first B-tile.
    @pl.when(pl.program_id(1) == 0)
    def _():
        part_ref[...] = jnp.zeros_like(part_ref)

    mh = mh_ref[...]        # [Bt, M]       bf16
    pu = pu_ref[...]        # [M, D]        bf16 (resident across the grid)
    emb = emb_ref[...]      # [Bt, N+1, D]  f32
    side = side_ref[...]    # [Bt, N+2]     f32

    # user_embeds[b] = sum_{i in interacted(b)} pu[i]  (multi-hot matmul on MXU)
    # TODO(synk): for production m_item (1e5+), replace this dense multi-hot
    # matmul with a PrefetchScalarGridSpec index-list DMA gather of pu rows.
    ue = jnp.dot(mh, pu, preferred_element_type=jnp.float32)     # [Bt, D] f32

    num = side[:, 0:1]               # [Bt, 1]   user_item_num
    b_cat = side[:, 1:]              # [Bt, N+1] (pos bias, then neg biases)

    # t = num ** (-alpha); single EUP rsqrt when alpha == 0.5.
    # NOTE: num == 0 gives inf, exactly like the PyTorch pow(num, -alpha).
    if alpha == 0.5:
        t = lax.rsqrt(num)
    else:
        t = jnp.exp(-alpha * jnp.log(num))

    # Fused positive+negative scores: one batched contraction on the MXU —
    # no materialized [B, N, D] broadcast temp, no lane-axis (XLU) reduction.
    dots = jnp.einsum('bqd,bnd->bqn', ue[:, None, :], emb,
                      preferred_element_type=jnp.float32)[:, 0, :]  # [Bt, N+1]
    scores = t * dots + b_cat        # [Bt, N+1]
    pos_scores = scores[:, 0:1]      # [Bt, 1]
    neg_scores = scores[:, 1:]       # [Bt, N]

    # MSELoss(reduction='sum')(ones, pos_scores - neg_scores)
    diff = 1.0 - (pos_scores - neg_scores)
    mse = jnp.sum(diff * diff)

    reg = (bata * jnp.sum(ue * ue)
           + bata * jnp.sum(emb * emb)         # = ||pos_emb||^2 + ||neg_emb||^2
           + lamda * jnp.sum(b_cat * b_cat))   # = ||b_pos||^2  + ||b_neg||^2

    part_ref[...] += jnp.broadcast_to(mse + reg, part_ref.shape)


def _pick_b_tile(B, M, n_items, D, budget_bytes=8 << 20):
    """Largest 16-aligned divisor of B whose double-buffered slabs fit budget."""
    if B % 16 != 0:
        return B                       # single full-B tile (block == full dims)
    per_row = M * 2 + n_items * D * 4 + (n_items + 1) * 4
    bt = 16
    cand = 16
    while cand <= B:
        if B % cand == 0 and 2 * cand * per_row <= budget_bytes:
            bt = cand
        cand += 16
    return bt


def fism_loss_pallas(multi_hot, pu, cat_emb, side, *, bata, lamda, alpha,
                     b_tile=None, n_partials=2):
    B, M = multi_hot.shape
    _, n_items, D = cat_emb.shape          # n_items = 1 + num_negatives
    assert side.shape == (B, n_items + 1)

    if b_tile is None:
        b_tile = _pick_b_tile(B, M, n_items, D)
    assert B % b_tile == 0
    g = B // b_tile
    # Independent partial-loss slices so the B grid can shard across v7x cores.
    c = n_partials if (g % n_partials == 0 and g >= n_partials) else 1
    g_per = g // c

    mh_bf16 = multi_hot.astype(jnp.bfloat16)   # interaction counts: exact in bf16
    pu_bf16 = pu.astype(jnp.bfloat16)

    kernel = functools.partial(_fism_loss_kernel, bata=float(bata),
                               lamda=float(lamda), alpha=float(alpha))

    def row(ci, gi):                   # B-tile index handled by (ci, gi)
        return ci * g_per + gi

    # Double-buffered tile footprint + resident pu + partials, with headroom.
    tile_bytes = (2 * b_tile * M * 2 + 2 * M * D * 2
                  + 2 * b_tile * n_items * D * 4
                  + 2 * b_tile * (n_items + 1) * 4 + c * 4)
    vmem_limit = int(min(max(4 * tile_bytes, 8 << 20), 48 << 20))

    partials = pl.pallas_call(
        kernel,
        out_shape=jax.ShapeDtypeStruct((c, 1, 1), jnp.float32),
        grid=(c, g_per),
        in_specs=[
            pl.BlockSpec((b_tile, M), lambda ci, gi: (row(ci, gi), 0)),
            pl.BlockSpec((M, D), lambda ci, gi: (0, 0)),          # resident
            pl.BlockSpec((b_tile, n_items, D),
                         lambda ci, gi: (row(ci, gi), 0, 0)),
            pl.BlockSpec((b_tile, n_items + 1),
                         lambda ci, gi: (row(ci, gi), 0)),
        ],
        out_specs=pl.BlockSpec((1, 1, 1), lambda ci, gi: (ci, 0, 0)),
        compiler_params=pltpu.CompilerParams(
            dimension_semantics=("parallel", "arbitrary"),
            vmem_limit_bytes=vmem_limit),
    )(mh_bf16, pu_bf16, cat_emb, side)
    return jnp.sum(partials)


if __name__ == "__main__":
    # module args: dim=32, n_user=16, m_item=64, bata=0.01, lamda=0.01, alpha=0.5
    D, M, NU = 32, 64, 16
    B, N = 64, 4                       # batch of sampled users, negatives per user
    bata, lamda, alpha = 0.01, 0.01, 0.5

    key = jax.random.PRNGKey(0)
    k_qi, k_pu, k_bi, k_pos, k_neg = jax.random.split(key, 5)

    # parameters (qi/pu as in module __init__; bi small nonzero to exercise bias path)
    qi = 0.001 * jax.random.normal(k_qi, (M, D), jnp.float32)
    pu = 0.001 * jax.random.normal(k_pu, (M, D), jnp.float32)
    bi = 0.001 * jax.random.normal(k_bi, (M, 1), jnp.float32)

    # deterministic ragged interaction histories per user
    interacted_items = {u: [(u * 5 + 3 * j) % M for j in range(2 + (u % 3))]
                        for u in range(NU)}
    users = np.arange(B, dtype=np.int32) % NU
    pos_items = jax.random.randint(k_pos, (B,), 0, M, dtype=jnp.int32)
    neg_items = jax.random.randint(k_neg, (B, N), 0, M, dtype=jnp.int32)

    # ragged history -> dense multi-hot counts (glue); summation runs in-kernel
    multi_hot = np.zeros((B, M), np.float32)
    num = np.zeros((B, 1), np.float32)
    for b, u in enumerate(users):
        for it in interacted_items[int(u)]:
            multi_hot[b, it] += 1.0
        num[b, 0] = float(len(interacted_items[int(u)]))
    multi_hot = jnp.asarray(multi_hot)
    num = jnp.asarray(num)

    # embedding gathers (glue), packed lane-dense for the kernel
    pos_emb = qi[pos_items]                        # [B, D]
    neg_emb = qi[neg_items]                        # [B, N, D]
    b_pos = bi[pos_items]                          # [B, 1]
    b_neg = bi[neg_items][:, :, 0]                 # [B, N]
    cat_emb = jnp.concatenate([pos_emb[:, None, :], neg_emb], axis=1)  # [B, N+1, D]
    side = jnp.concatenate([num, b_pos, b_neg], axis=1)                # [B, N+2]

    loss = fism_loss_pallas(multi_hot, pu, cat_emb, side,
                            bata=bata, lamda=lamda, alpha=alpha, b_tile=16)
    loss = jax.block_until_ready(loss)

    # pure-JAX reference (same bf16 rounding of the matmul operands)
    mh_r = multi_hot.astype(jnp.bfloat16).astype(jnp.float32)
    pu_r = pu.astype(jnp.bfloat16).astype(jnp.float32)
    ue = mh_r @ pu_r
    t = num ** (-alpha)
    ps = t * jnp.sum(ue * pos_emb, axis=1, keepdims=True) + b_pos
    ns = t * jnp.sum(ue[:, None, :] * neg_emb, axis=2) + b_neg
    mse_ref = jnp.sum((1.0 - (ps - ns)) ** 2)
    reg_ref = (bata * jnp.sum(ue ** 2)
               + bata * (jnp.sum(pos_emb ** 2) + jnp.sum(neg_emb ** 2))
               + lamda * (jnp.sum(b_pos ** 2) + jnp.sum(b_neg ** 2)))
    ref = float(mse_ref + reg_ref)
    assert np.allclose(float(loss), ref, rtol=1e-4, atol=1e-4), (float(loss), ref)

    print("KERNEL_OK")
</pallas_src>

<mosaic_0001>
module attributes {stable_mosaic.version = 11 : i64} {
  func.func @_fism_loss_kernel(%arg0: i32, %arg1: i32, %arg2: memref<16x64xbf16, #tpu.memory_space<vmem>>, %arg3: memref<64x32xbf16, #tpu.memory_space<vmem>>, %arg4: memref<16x5x32xf32, #tpu.memory_space<vmem>>, %arg5: memref<16x6xf32, #tpu.memory_space<vmem>>, %arg6: memref<1x1x1xf32, #tpu.memory_space<vmem>>) attributes {dimension_semantics = [#tpu.dimension_semantics<parallel>, #tpu.dimension_semantics<arbitrary>], iteration_bounds = array<i64: 2, 2>, scalar_prefetch = 0 : i64, scratch_operands = 0 : i64, tpu.core_type = #tpu.core_type<tc>, window_params = [{transform_indices = @transform_0, window_bounds = array<i64: 16, 64>}, {pipeline_mode = #tpu.pipeline_mode<synchronous>, transform_indices = @transform_1, window_bounds = array<i64: 64, 32>}, {transform_indices = @transform_2, window_bounds = array<i64: 16, 5, 32>}, {transform_indices = @transform_3, window_bounds = array<i64: 16, 6>}, {transform_indices = @transform_4, window_bounds = array<i64: 1, 1, 1>}]} {
    %c0_i32 = arith.constant 0 : i32
    %0 = arith.cmpi eq, %arg1, %c0_i32 : i32
    %1 = arith.extui %0 : i1 to i32
    %c0_i32_0 = arith.constant 0 : i32
    %2 = arith.cmpi ne, %1, %c0_i32_0 : i32
    scf.if %2 {
      %cst_24 = arith.constant 0.000000e+00 : f32
      %53 = vector.broadcast %cst_24 : f32 to vector<1x1x1xf32>
      %c0_25 = arith.constant 0 : index
      %c0_26 = arith.constant 0 : index
      %c0_27 = arith.constant 0 : index
      %54 = vector.load %arg6[%c0_25, %c0_26, %c0_27] : memref<1x1x1xf32, #tpu.memory_space<vmem>>, vector<1x1x1xf32>
      tpu.vector_store %arg6[%c0_25, %c0_26, %c0_27], %53 {strides = array<i32>} : memref<1x1x1xf32, #tpu.memory_space<vmem>>, vector<1x1x1xf32>,
    } else {
    }
    %c0 = arith.constant 0 : index
    %c0_1 = arith.constant 0 : index
    %3 = vector.load %arg2[%c0, %c0_1] : memref<16x64xbf16, #tpu.memory_space<vmem>>, vector<16x64xbf16>
    %c0_2 = arith.constant 0 : index
    %c0_3 = arith.constant 0 : index
    %4 = vector.load %arg3[%c0_2, %c0_3] : memref<64x32xbf16, #tpu.memory_space<vmem>>, vector<64x32xbf16>
    %c0_4 = arith.constant 0 : index
    %c0_5 = arith.constant 0 : index
    %c0_6 = arith.constant 0 : index
    %5 = vector.load %arg4[%c0_4, %c0_5, %c0_6] : memref<16x5x32xf32, #tpu.memory_space<vmem>>, vector<16x5x32xf32>
    %c0_7 = arith.constant 0 : index
    %c0_8 = arith.constant 0 : index
    %6 = vector.load %arg5[%c0_7, %c0_8] : memref<16x6xf32, #tpu.memory_space<vmem>>, vector<16x6xf32>
    %cst = arith.constant dense<0.000000e+00> : vector<16x32xf32>
    %7 = tpu.matmul %3, %4, %cst {dimension_numbers = #tpu.dot_dimension_numbers<[1], [0], [0], [1], [0, 0, 1, 1], [], []>} : vector<16x64xbf16>, vector<64x32xbf16>, vector<16x32xf32> -> vector<16x32xf32>
    %8 = vector.extract_strided_slice %6 {offsets = [0, 0], sizes = [16, 1], strides = [1, 1]} : vector<16x6xf32> to vector<16x1xf32>
    %9 = vector.extract_strided_slice %6 {offsets = [0, 1], sizes = [16, 5], strides = [1, 1]} : vector<16x6xf32> to vector<16x5xf32>
    %10 = math.rsqrt %8 : vector<16x1xf32>
    %11 = vector.shape_cast %7 : vector<16x32xf32> to vector<16x1x32xf32>
    "tpu.trace_start"() <{level = 10 : i32, message = "bqd,bnd->bqn"}> : () -> ()
    %cst_9 = arith.constant dense<0.000000e+00> : vector<16x1x5xf32>
    %12 = tpu.matmul %11, %5, %cst_9 {dimension_numbers = #tpu.dot_dimension_numbers<[2], [2], [1], [1], [0, 0, 0, 1, 1, 1], [0], [0]>} : vector<16x1x32xf32>, vector<16x5x32xf32>, vector<16x1x5xf32> -> vector<16x1x5xf32>
    "tpu.trace_stop"() : () -> ()
    %13 = vector.shape_cast %12 : vector<16x1x5xf32> to vector<16x5xf32>
    %14 = vector.broadcast %10 : vector<16x1xf32> to vector<16x5xf32>
    %15 = arith.mulf %14, %13 : vector<16x5xf32>
    %16 = arith.addf %15, %9 : vector<16x5xf32>
    %17 = vector.extract_strided_slice %16 {offsets = [0, 0], sizes = [16, 1], strides = [1, 1]} : vector<16x5xf32> to vector<16x1xf32>
    %18 = vector.extract_strided_slice %16 {offsets = [0, 1], sizes = [16, 4], strides = [1, 1]} : vector<16x5xf32> to vector<16x4xf32>
    %19 = vector.broadcast %17 : vector<16x1xf32> to vector<16x4xf32>
    %20 = arith.subf %19, %18 : vector<16x4xf32>
    %cst_10 = arith.constant 1.000000e+00 : f32
    %21 = vector.broadcast %cst_10 : f32 to vector<16x4xf32>
    %22 = arith.subf %21, %20 : vector<16x4xf32>
    %23 = arith.mulf %22, %22 : vector<16x4xf32>
    %24 = vector.shape_cast %23 : vector<16x4xf32> to vector<1x16x4xf32>
    %cst_11 = arith.constant dense<0.000000e+00> : vector<1xf32>
    %25 = vector.multi_reduction <add>, %24, %cst_11 [1, 2] : vector<1x16x4xf32> to vector<1xf32>
    %26 = vector.shape_cast %25 : vector<1xf32> to vector<1x1x1xf32>
    %27 = vector.extract %26[0, 0, 0] : f32 from vector<1x1x1xf32>
    %28 = arith.mulf %7, %7 : vector<16x32xf32>
    %29 = vector.shape_cast %28 : vector<16x32xf32> to vector<1x16x32xf32>
    %cst_12 = arith.constant dense<0.000000e+00> : vector<1xf32>
    %30 = vector.multi_reduction <add>, %29, %cst_12 [1, 2] : vector<1x16x32xf32> to vector<1xf32>
    %31 = vector.shape_cast %30 : vector<1xf32> to vector<1x1x1xf32>
    %32 = vector.extract %31[0, 0, 0] : f32 from vector<1x1x1xf32>
    %cst_13 = arith.constant 0.00999999977 : f32
    %33 = arith.mulf %cst_13, %32 : f32
    %34 = arith.mulf %5, %5 : vector<16x5x32xf32>
    %35 = vector.shape_cast %34 : vector<16x5x32xf32> to vector<1x16x5x32xf32>
    %cst_14 = arith.constant dense<0.000000e+00> : vector<1xf32>
    %36 = vector.multi_reduction <add>, %35, %cst_14 [1, 2, 3] : vector<1x16x5x32xf32> to vector<1xf32>
    %37 = vector.shape_cast %36 : vector<1xf32> to vector<1x1x1x1xf32>
    %38 = vector.extract %37[0, 0, 0, 0] : f32 from vector<1x1x1x1xf32>
    %cst_15 = arith.constant 0.00999999977 : f32
    %39 = arith.mulf %cst_15, %38 : f32
    %40 = arith.addf %33, %39 : f32
    %41 = arith.mulf %9, %9 : vector<16x5xf32>
    %42 = vector.shape_cast %41 : vector<16x5xf32> to vector<1x16x5xf32>
    %cst_16 = arith.constant dense<0.000000e+00> : vector<1xf32>
    %43 = vector.multi_reduction <add>, %42, %cst_16 [1, 2] : vector<1x16x5xf32> to vector<1xf32>
    %44 = vector.shape_cast %43 : vector<1xf32> to vector<1x1x1xf32>
    %45 = vector.extract %44[0, 0, 0] : f32 from vector<1x1x1xf32>
    %cst_17 = arith.constant 0.00999999977 : f32
    %46 = arith.mulf %cst_17, %45 : f32
    %47 = arith.addf %40, %46 : f32
    %c0_18 = arith.constant 0 : index
    %c0_19 = arith.constant 0 : index
    %c0_20 = arith.constant 0 : index
    %48 = vector.load %arg6[%c0_18, %c0_19, %c0_20] : memref<1x1x1xf32, #tpu.memory_space<vmem>>, vector<1x1x1xf32>
    %49 = arith.addf %27, %47 : f32
    %50 = vector.broadcast %49 : f32 to vector<1x1x1xf32>
    %51 = arith.addf %48, %50 : vector<1x1x1xf32>
    %c0_21 = arith.constant 0 : index
    %c0_22 = arith.constant 0 : index
    %c0_23 = arith.constant 0 : index
    %52 = vector.load %arg6[%c0_21, %c0_22, %c0_23] : memref<1x1x1xf32, #tpu.memory_space<vmem>>, vector<1x1x1xf32>
    tpu.vector_store %arg6[%c0_21, %c0_22, %c0_23], %51 {strides = array<i32>} : memref<1x1x1xf32, #tpu.memory_space<vmem>>, vector<1x1x1xf32>,
    return
  }
  func.func @transform_0(%arg0: i32, %arg1: i32) -> (i32, i32) {
    %c2_i32 = arith.constant 2 : i32
    %0 = arith.muli %arg0, %c2_i32 : i32
    %1 = arith.addi %0, %arg1 : i32
    %c0_i32 = arith.constant 0 : i32
    %c0_i32_0 = arith.constant 0 : i32
    return %1, %c0_i32 : i32, i32
  }
  func.func @transform_1(%arg0: i32, %arg1: i32) -> (i32, i32) {
    %c0_i32 = arith.constant 0 : i32
    %c0_i32_0 = arith.constant 0 : i32
    %c0_i32_1 = arith.constant 0 : i32
    return %c0_i32, %c0_i32_0 : i32, i32
  }
  func.func @transform_2(%arg0: i32, %arg1: i32) -> (i32, i32, i32) {
    %c2_i32 = arith.constant 2 : i32
    %0 = arith.muli %arg0, %c2_i32 : i32
    %1 = arith.addi %0, %arg1 : i32
    %c0_i32 = arith.constant 0 : i32
    %c0_i32_0 = arith.constant 0 : i32
    %c0_i32_1 = arith.constant 0 : i32
    return %1, %c0_i32, %c0_i32_0 : i32, i32, i32
  }
  func.func @transform_3(%arg0: i32, %arg1: i32) -> (i32, i32) {
    %c2_i32 = arith.constant 2 : i32
    %0 = arith.muli %arg0, %c2_i32 : i32
    %1 = arith.addi %0, %arg1 : i32
    %c0_i32 = arith.constant 0 : i32
    %c0_i32_0 = arith.constant 0 : i32
    return %1, %c0_i32 : i32, i32
  }
  func.func @transform_4(%arg0: i32, %arg1: i32) -> (i32, i32, i32) {
    %c0_i32 = arith.constant 0 : i32
    %c0_i32_0 = arith.constant 0 : i32
    %c0_i32_1 = arith.constant 0 : i32
    return %arg0, %c0_i32, %c0_i32_0 : i32, i32, i32
  }
}

</mosaic_0001>

<llo_original>
// kernel: tpu_custom_call.1
$region0: #{tpu_custom_call.1}
  #allocation0 [shape = 'u32[]', space=smem, size = 0x4, offset = 0x4, fixed_abs, tag = 'smem constant byte address 0x4 - core index']
  #allocation1 [shape = 'u32[144,128]{1,0:T(1,128)}', space=vmem, size = 0x12000, scoped, tag = 'internal scratch']
  %s0 = inlined_call_operand.vmem [shape: bf16[64,64], index: 0, kind: input, shape index: {}]
  %s1 = inlined_call_operand.vmem [shape: bf16[64,32], index: 1, kind: input, shape index: {}]
  %s2 = inlined_call_operand.vmem [shape: f32[64,5,32], index: 2, kind: input, shape index: {}]
  %s3 = inlined_call_operand.vmem [shape: f32[64,6], index: 3, kind: input, shape index: {}]
  %s4 = inlined_call_operand.vmem [shape: f32[2,1,1], index: 4, kind: output, shape index: {}]
  %s5 = sld [smem:[#allocation0]]
  $region53: #{tpu_custom_call.1} parent=0
    _
  %s7 = ssub.s32 1, %s5
  %s8 = scalar_select 0, %s7, %s5
  loop: start=0, step=1, limit=6
  $region2: #{tpu_custom_call.1} parent=0 // loop_pre_header
    _
  $region3: #{tpu_custom_call.1} parent=0 // loop_header
    %s10 = sphi 0, %s14
    %p11 = scmp.ge.s32.totalorder %s10, 6
    %s17 = sphi 0, %s29
    %s18 = sphi 0, %s25
    %s19 = sphi 0, %s17
    %s20 = sphi 0, %s18
    %s21 = sphi 0, %s19
    %s22 = sphi 0, %s20
    %s36 = sphi 0, %s38
    %s39 = sphi 0, %s36
    %s40 = sphi 0, %s39
    %s56 = sphi 0, %s40
    %s60 = sphi 0, %s60
    %s62 = sphi 0, %s60
    %s63 = sphi 0, %s62
    %s77 = sphi 0, %s63
    %s87 = sphi 0, %s89
    %s90 = sphi 0, %s87
    %s91 = sphi 0, %s90
    %s107 = sphi 0, %s91
    %s117 = sphi 0, %s119
    %s120 = sphi 0, %s117
    %s121 = sphi 0, %s120
    %s137 = sphi 0, %s121
    %s143 = sphi 0, %s145
    %s146 = sphi 0, %s143
    %s147 = sphi 0, %s146
    %s163 = sphi 0, %s147
  $region4: #{tpu_custom_call.1} parent=0 // loop_header_branch
    %13 = sbr.rel (%p11) target = $region8
  $region5: #{tpu_custom_call.1} parent=0 // loop_body
    %s15 = ssub.s32 %s10, 1
    %s16 = ssub.s32 %s10, 2
    %s23 = sadd.s32 1, %s18
    %p24 = scmp.ge.s32.totalorder %s23, 2
    %s25 = scalar_select %p24, 0, %s23
    %s26 = sadd.s32 1, %s17
    %s27 = scalar_select %p24, %s26, %s17
    %p28 = scmp.ge.s32.totalorder %s27, 2
    %s29 = scalar_select %p28, 0, %s27
    %s30 = smul.u32 %s17, 2
    %s31 = sadd.s32 %s30, %s18
    %s32 = smul.u32 %s29, 2
    %s33 = sadd.s32 %s32, %s25
    %s34 = ssub.s32 %s31, %s33
    %p35 = scmp.eq.s32.totalorder %s34, 0
    %s37 = sadd.s32 %s36, 1
    %s38 = scalar_select %p35, %s36, %s37
    %p41 = pneg %p35
    %p42 = scmp.eq.s32.totalorder %s10, 3
    %p43 = por %p41, %p42
    %p44 = scmp.ne.s32.totalorder %s36, %s39
    %p45 = scmp.eq.s32.totalorder %s10, 0
    %p46 = por %p44, %p45
    %p47 = scmp.ne.s32.totalorder %s36, %s39
    %p48 = scmp.eq.s32.totalorder %s15, 3
    %p49 = por %p47, %p48
    %p50 = scmp.ne.s32.totalorder %s39, %s40
    %p51 = scmp.eq.s32.totalorder %s15, 0
    %p52 = por %p50, %p51
    %p53 = scmp.ne.s32.totalorder %s39, %s40
    %p54 = scmp.eq.s32.totalorder %s16, 3
    %p55 = por %p53, %p54
    %p57 = scmp.ne.s32.totalorder %s40, %s56
    %p58 = scmp.eq.s32.totalorder %s16, 0
    %p59 = por %p57, %p58
    %s61 = sadd.s32 %s60, 1
    %p64 = scmp.eq.s32.totalorder %s10, 3
    %p65 = scmp.ne.s32.totalorder %s60, %s62
    %p66 = scmp.eq.s32.totalorder %s10, 0
    %p67 = por %p65, %p66
    %p68 = scmp.ne.s32.totalorder %s60, %s62
    %p69 = scmp.eq.s32.totalorder %s15, 3
    %p70 = por %p68, %p69
    %p71 = scmp.ne.s32.totalorder %s62, %s63
    %p72 = scmp.eq.s32.totalorder %s15, 0
    %p73 = por %p71, %p72
    %p74 = scmp.ne.s32.totalorder %s62, %s63
    %p75 = scmp.eq.s32.totalorder %s16, 3
    %p76 = por %p74, %p75
    %p78 = scmp.ne.s32.totalorder %s63, %s77
    %p79 = scmp.eq.s32.totalorder %s16, 0
    %p80 = por %p78, %p79
    %s81 = smul.u32 %s17, 2
    %s82 = sadd.s32 %s81, %s18
    %s83 = smul.u32 %s29, 2
    %s84 = sadd.s32 %s83, %s25
    %s85 = ssub.s32 %s82, %s84
    %p86 = scmp.eq.s32.totalorder %s85, 0
    %s88 = sadd.s32 %s87, 1
    %s89 = scalar_select %p86, %s87, %s88
    %p92 = pneg %p86
    %p93 = scmp.eq.s32.totalorder %s10, 3
    %p94 = por %p92, %p93
    %p95 = scmp.ne.s32.totalorder %s87, %s90
    %p96 = scmp.eq.s32.totalorder %s10, 0
    %p97 = por %p95, %p96
    %p98 = scmp.ne.s32.totalorder %s87, %s90
    %p99 = scmp.eq.s32.totalorder %s15, 3
    %p100 = por %p98, %p99
    %p101 = scmp.ne.s32.totalorder %s90, %s91
    %p102 = scmp.eq.s32.totalorder %s15, 0
    %p103 = por %p101, %p102
    %p104 = scmp.ne.s32.totalorder %s90, %s91
    %p105 = scmp.eq.s32.totalorder %s16, 3
    %p106 = por %p104, %p105
    %p108 = scmp.ne.s32.totalorder %s91, %s107
    %p109 = scmp.eq.s32.totalorder %s16, 0
    %p110 = por %p108, %p109
    %s111 = smul.u32 %s17, 2
    %s112 = sadd.s32 %s111, %s18
    %s113 = smul.u32 %s29, 2
    %s114 = sadd.s32 %s113, %s25
    %s115 = ssub.s32 %s112, %s114
    %p116 = scmp.eq.s32.totalorder %s115, 0
    %s118 = sadd.s32 %s117, 1
    %s119 = scalar_select %p116, %s117, %s118
    %p122 = pneg %p116
    %p123 = scmp.eq.s32.totalorder %s10, 3
    %p124 = por %p122, %p123
    %p125 = scmp.ne.s32.totalorder %s117, %s120
    %p126 = scmp.eq.s32.totalorder %s10, 0
    %p127 = por %p125, %p126
    %p128 = scmp.ne.s32.totalorder %s117, %s120
    %p129 = scmp.eq.s32.totalorder %s15, 3
    %p130 = por %p128, %p129
    %p131 = scmp.ne.s32.totalorder %s120, %s121
    %p132 = scmp.eq.s32.totalorder %s15, 0
    %p133 = por %p131, %p132
    %p134 = scmp.ne.s32.totalorder %s120, %s121
    %p135 = scmp.eq.s32.totalorder %s16, 3
    %p136 = por %p134, %p135
    %p138 = scmp.ne.s32.totalorder %s121, %s137
    %p139 = scmp.eq.s32.totalorder %s16, 0
    %p140 = por %p138, %p139
    %s141 = ssub.s32 %s17, %s29
    %p142 = scmp.eq.s32.totalorder %s141, 0
    %s144 = sadd.s32 %s143, 1
    %s145 = scalar_select %p142, %s143, %s144
    %p148 = pneg %p142
    %p149 = scmp.eq.s32.totalorder %s10, 3
    %p150 = por %p148, %p149
    %p151 = scmp.ne.s32.totalorder %s143, %s146
    %p152 = scmp.eq.s32.totalorder %s10, 0
    %p153 = por %p151, %p152
    %p154 = scmp.ne.s32.totalorder %s143, %s146
    %p155 = scmp.eq.s32.totalorder %s15, 3
    %p156 = por %p154, %p155
    %p157 = scmp.ne.s32.totalorder %s146, %s147
    %p158 = scmp.eq.s32.totalorder %s15, 0
    %p159 = por %p157, %p158
    %p160 = scmp.ne.s32.totalorder %s146, %s147
    %p161 = scmp.eq.s32.totalorder %s16, 3
    %p162 = por %p160, %p161
    %p164 = scmp.ne.s32.totalorder %s147, %s163
    %p165 = scmp.eq.s32.totalorder %s16, 0
    %p166 = por %p164, %p165
    %p167 = scmp.le.s32.totalorder 1, %s10
    %p168 = scmp.lt.s32.totalorder %s10, 5
    %p169 = pnand %p167, %p168
    %p170 = pneg %p169
    // Predicated region
    $region9: #{tpu_custom_call.1} parent=5 // pred_check
      _
    $region10: #{tpu_custom_call.1} parent=5 // pred_check_branch
      %172 = sbr.rel (%p169) target = $region12
    $region11: #{tpu_custom_call.1} parent=5 // pred_region
      %s173 = ssub.s32 %s10, 1
      // Predicated region
      $region13: #{tpu_custom_call.1} parent=11 // pred_check
        %p174 = pneg %p73
      $region14: #{tpu_custom_call.1} parent=11 // pred_check_branch
        %176 = sbr.rel (%p174) target = $region16
      $region15: #{tpu_custom_call.1} parent=11 // pred_region
        _
      $region16: #{tpu_custom_call.1} parent=11 // pred_fallthru
        _
    $region12: #{tpu_custom_call.1} parent=5 // pred_fallthru
      _
    %p177 = scmp.lt.s32.totalorder %s10, 4
    // Predicated region
    $region17: #{tpu_custom_call.1} parent=5 // pred_check
      %p178 = pneg %p177
    $region18: #{tpu_custom_call.1} parent=5 // pred_check_branch
      %180 = sbr.rel (%p178) target = $region20
    $region19: #{tpu_custom_call.1} parent=5 // pred_region
      // Predicated region
      $region21: #{tpu_custom_call.1} parent=19 // pred_check
        %p181 = pneg %p46
      $region22: #{tpu_custom_call.1} parent=19 // pred_check_branch
        %183 = sbr.rel (%p181) target = $region24
      $region23: #{tpu_custom_call.1} parent=19 // pred_region
        %s184 = smul.u32 %s17, 2
        %s185 = sadd.s32 %s184, %s18
        %s186 = smul.u32 2, %s185
        %p187 = scmp.lt.s32.totalorder %s186, 7
        %s188 = scalar_select %p187, %s186, 7
        %s189 = smul.addr %s188, 4
        %s190 = scalar_lea.vmem %s0, %s189
        %s191 = smul.u32 %s17, 2
        %s192 = sadd.s32 %s191, %s18
        %s193 = smul.u32 2, %s192
      $region24: #{tpu_custom_call.1} parent=19 // pred_fallthru
        _
      // Predicated region
      $region25: #{tpu_custom_call.1} parent=19 // pred_check
        %p194 = pneg %p97
      $region26: #{tpu_custom_call.1} parent=19 // pred_check_branch
        %196 = sbr.rel (%p194) target = $region28
      $region27: #{tpu_custom_call.1} parent=19 // pred_region
        %s197 = smul.u32 %s17, 2
        %s198 = sadd.s32 %s197, %s18
        %s199 = smul.u32 16, %s198
        %p200 = scmp.lt.s32.totalorder %s199, 63
        %s201 = scalar_select %p200, %s199, 63
        %s202 = smul.addr %s201, 8
        %s203 = scalar_lea.vmem %s2, %s202
        %s204 = smul.u32 %s17, 2
        %s205 = sadd.s32 %s204, %s18
        %s206 = smul.u32 16, %s205
      $region28: #{tpu_custom_call.1} parent=19 // pred_fallthru
        _
      // Predicated region
      $region29: #{tpu_custom_call.1} parent=19 // pred_check
        %p207 = pneg %p127
      $region30: #{tpu_custom_call.1} parent=19 // pred_check_branch
        %209 = sbr.rel (%p207) target = $region32
      $region31: #{tpu_custom_call.1} parent=19 // pred_region
        %s210 = smul.u32 %s17, 2
        %s211 = sadd.s32 %s210, %s18
        %s212 = smul.u32 2, %s211
        %p213 = scmp.lt.s32.totalorder %s212, 7
        %s214 = scalar_select %p213, %s212, 7
        %s215 = smul.addr %s214, 8
        %s216 = scalar_lea.vmem %s3, %s215
        %s217 = smul.u32 %s17, 2
        %s218 = sadd.s32 %s217, %s18
        %s219 = smul.u32 2, %s218
      $region32: #{tpu_custom_call.1} parent=19 // pred_fallthru
        _
    $region20: #{tpu_custom_call.1} parent=5 // pred_fallthru
      _
    %p220 = scmp.le.s32.totalorder 1, %s10
    %p221 = scmp.lt.s32.totalorder %s10, 5
    %p222 = pnand %p220, %p221
    %p223 = pneg %p222
    // Predicated region
    $region33: #{tpu_custom_call.1} parent=5 // pred_check
      _
    $region34: #{tpu_custom_call.1} parent=5 // pred_check_branch
      %225 = sbr.rel (%p222) target = $region36
    $region35: #{tpu_custom_call.1} parent=5 // pred_region
      %s226 = ssub.s32 %s10, 1
      %s227 = smul.u32 %s19, 2
      %s228 = sadd.s32 %s227, %s20
      %s229 = smul.u32 2, %s228
      %p230 = scmp.lt.s32.totalorder %s229, 7
      %s231 = scalar_select %p230, %s229, 7
      %s232 = smul.addr %s231, 4
      %s233 = scalar_lea.vmem %s0, %s232
      %p234 = pneg %p52
      %p235 = pneg %p49
      %p236 = pneg %p73
      %p237 = pneg %p70
      %s238 = smul.u32 %s19, 2
      %s239 = sadd.s32 %s238, %s20
      %s240 = smul.u32 16, %s239
      %p241 = scmp.lt.s32.totalorder %s240, 63
      %s242 = scalar_select %p241, %s240, 63
      %s243 = smul.addr %s242, 8
      %s244 = scalar_lea.vmem %s2, %s243
      %p245 = pneg %p103
      %p246 = pneg %p100
      %s247 = smul.u32 %s19, 2
      %s248 = sadd.s32 %s247, %s20
      %s249 = smul.u32 2, %s248
      %p250 = scmp.lt.s32.totalorder %s249, 7
      %s251 = scalar_select %p250, %s249, 7
      %s252 = smul.addr %s251, 8
      %s253 = scalar_lea.vmem %s3, %s252
      %p254 = pneg %p133
      %p255 = pneg %p130
      %p256 = pneg %p159
      %p257 = pneg %p156
      %p258 = scmp.lt.s32.totalorder %s19, 1
      %s259 = scalar_select %p258, %s19, 1
      %s260 = scalar_lea.vmem %s4, %s259
      %s261 = smul.u32 %s19, 2
      %s262 = sadd.s32 %s261, %s20
      %s263 = smul.u32 2, %s262
      %p264 = scmp.lt.s32.totalorder %s263, 7
      %s265 = scalar_select %p264, %s263, 7
      %s266 = smul.addr %s265, 4
      %s267 = scalar_lea.vmem %s0, %s266
      %s268 = smul.u32 %s19, 2
      %s269 = sadd.s32 %s268, %s20
      %s270 = smul.u32 2, %s269
      %s271 = smul.u32 %s19, 2
      %s272 = sadd.s32 %s271, %s20
      %s273 = smul.u32 16, %s272
      %p274 = scmp.lt.s32.totalorder %s273, 63
      %s275 = scalar_select %p274, %s273, 63
      %s276 = smul.addr %s275, 8
      %s277 = scalar_lea.vmem %s2, %s276
      %s278 = smul.u32 %s19, 2
      %s279 = sadd.s32 %s278, %s20
      %s280 = smul.u32 16, %s279
      %s281 = smul.u32 %s19, 2
      %s282 = sadd.s32 %s281, %s20
      %s283 = smul.u32 2, %s282
      %p284 = scmp.lt.s32.totalorder %s283, 7
      %s285 = scalar_select %p284, %s283, 7
      %s286 = smul.addr %s285, 8
      %s287 = scalar_lea.vmem %s3, %s286
      %s288 = smul.u32 %s19, 2
      %s289 = sadd.s32 %s288, %s20
      %s290 = smul.u32 2, %s289
      %p291 = scmp.lt.s32.totalorder %s19, 1
      %s292 = scalar_select %p291, %s19, 1
      %s293 = scalar_lea.vmem %s4, %s292
      %p295 = scmp.eq.s32.totalorder %s20, 0
      // Predicated region
      $region37: #{tpu_custom_call.1} parent=35 // pred_check
        %p296 = pneg %p295
      $region38: #{tpu_custom_call.1} parent=35 // pred_check_branch
        %298 = sbr.rel (%p296) target = $region40
      $region39: #{tpu_custom_call.1} parent=35 // pred_region
        %vm299 = vcmask 0
        %300 = vst.msk [vmem:[%s293] sm:$0x1] %vm299, 0.0
      $region40: #{tpu_custom_call.1} parent=35 // pred_fallthru
        _
      %v301 = vld [vmem:[%s267] sm:$0xf]
      %v302 = vld [vmem:[%s267 + $0x4] sm:$0xf]
      %v303 = vld [vmem:[%s1] sm:$0xf]
      %v304 = vld [vmem:[%s1 + $0x4] sm:$0xf]
      %v305 = vld [vmem:[%s1 + $0x8] sm:$0xf]
      %v306 = vld [vmem:[%s1 + $0xc] sm:$0xf]
      %v307 = vld [vmem:[%s1 + $0x10] sm:$0xf]
      %v308 = vld [vmem:[%s1 + $0x14] sm:$0xf]
      %v309 = vld [vmem:[%s1 + $0x18] sm:$0xf]
      %v310 = vld [vmem:[%s1 + $0x1c] sm:$0xf]
      %v311 = vld [vmem:[%s277] sm:$0x1f]
      %v312 = vld [vmem:[%s277 + $0x8] sm:$0x1f]
      %v313 = vld [vmem:[%s277 + $0x10] sm:$0x1f]
      %v314 = vld [vmem:[%s277 + $0x18] sm:$0x1f]
      %v315 = vld [vmem:[%s277 + $0x20] sm:$0x1f]
      %v316 = vld [vmem:[%s277 + $0x28] sm:$0x1f]
      %v317 = vld [vmem:[%s277 + $0x30] sm:$0x1f]
      %v318 = vld [vmem:[%s277 + $0x38] sm:$0x1f]
      %v319 = vld [vmem:[%s277 + $0x40] sm:$0x1f]
      %v320 = vld [vmem:[%s277 + $0x48] sm:$0x1f]
      %v321 = vld [vmem:[%s277 + $0x50] sm:$0x1f]
      %v322 = vld [vmem:[%s277 + $0x58] sm:$0x1f]
      %v323 = vld [vmem:[%s277 + $0x60] sm:$0x1f]
      %v324 = vld [vmem:[%s277 + $0x68] sm:$0x1f]
      %v325 = vld [vmem:[%s277 + $0x70] sm:$0x1f]
      %v326 = vld [vmem:[%s277 + $0x78] sm:$0x1f]
      %v327 = vld [vmem:[%s287] sm:$0xff]
      %v328 = vld [vmem:[%s287 + $0x8] sm:$0xff]
      %v331 = vunpack.c.l.b16 %v301
      %v332 = vunpack.c.l.b16 %v302
      %v333 = vpack.c.b16 %v332, %v331
      %v342 = vunpack.c.l.b16 %v303
      %v343 = vunpack.c.l.b16 %v304
      %v344 = vunpack.c.l.b16 %v305
      %v345 = vunpack.c.l.b16 %v306
      %v346 = vunpack.c.l.b16 %v307
      %v347 = vunpack.c.l.b16 %v308
      %v348 = vunpack.c.l.b16 %v309
      %v349 = vunpack.c.l.b16 %v310
      %v350 = vpack.c.b16 %v343, %v342
      %v351 = vpack.c.b16 %v345, %v344
      %v352 = vpack.c.b16 %v347, %v346
      %v353 = vpack.c.b16 %v349, %v348
      %vm358 = vcmask 523264
      %v360 = vsel %vm358, %v333, 0
      %362 = vmatprep.subr.bf16.mxu0 0
      %363 = vmatpush1.bf16.msra.mxu0 0
      %364 = vmatprep.subr.bf16.mxu0 0
      %365 = vmatpush1.bf16.msra.mxu0 0
      %366 = vmatprep.subr.bf16.mxu0 0
      %367 = vmatpush1.bf16.msra.mxu0 0
      %368 = vmatprep.subr.bf16.mxu0 0
      %369 = vmatpush1.bf16.msra.mxu0 0
      %370 = vmatprep.subr.bf16.mxu0 0
      %371 = vmatpush1.bf16.msra.mxu0 %v353
      %372 = vmatprep.subr.bf16.mxu0 0
      %373 = vmatpush1.bf16.msra.mxu0 %v352
      %374 = vmatprep.subr.bf16.mxu0 0
      %375 = vmatpush1.bf16.msra.mxu0 %v351
      %376 = vmatprep.subr.bf16.mxu0 0
      %377 = vmatpush1.bf16.msra.mxu0 %v350
      %378 = vmatprep.subr.bf16.mxu0 0
      %379 = vmatpush2.bf16.msra.mxu0 0
      %380 = vmatprep.subr.bf16.mxu0 0
      %381 = vmatpush2.bf16.msra.mxu0 0
      %382 = vmatprep.subr.bf16.mxu0 0
      %383 = vmatpush2.bf16.msra.mxu0 0
      %384 = vmatprep.subr.bf16.mxu0 0
      %385 = vmatpush2.bf16.msra.mxu0 0
      %386 = vmatprep.subr.bf16.mxu0 0
      %387 = vmatpush2.bf16.msra.mxu0 0
      %388 = vmatprep.subr.bf16.mxu0 0
      %389 = vmatpush2.bf16.msra.mxu0 0
      %390 = vmatprep.subr.bf16.mxu0 0
      %391 = vmatpush2.bf16.msra.mxu0 0
      %392 = vmatprep.subr.bf16.mxu0 0
      %393 = vmatpush2.bf16.msra.mxu0 0
      %394 = vmatprep.mubr.bf16.mxu0 0
      %395 = vmatmul.mubr.bf16.gmra.mxu0 %v360
      %v396 = vpop.f32.mrf.mxu0
      %v397 = vadd.f32 0.0, %v396
      %v398 = vpop.f32.mrf.mxu0
      %v399 = vpop.f32.mrf.mxu0
      %v400 = vadd.f32 0.0, %v399
      %v401 = vpop.f32.mrf.mxu0
      %402 = vdwg.mxu0
      %v403 = vrsqrt.pop %v327
      %v404 = vrsqrt.pop %v328
      %v407 = vcombine.high %v397, %v397
      %v409 = vunpack.c.l.s4 1966171168
      %v410 = vunpack.c.0.s8 %v409
      %v411 = vlaneseq
      %v412 = vshrl.u32 %v411, 7
      %v413 = vsub.s32 %v410, %v412
      %v414 = vrot.slane %v397, %v413
      %v416 = vunpack.c.l.s4 1966171168
      %v417 = vunpack.c.0.s8 %v416
      %v418 = vlaneseq
      %v419 = vshrl.u32 %v418, 7
      %v420 = vsub.s32 %v417, %v419
      %v421 = vrot.slane %v407, %v420
      %v422 = vcombine.high %v414, %v414
      %v423 = vcombine.high %v421, %v421
      %v425 = vunpack.c.l.s4 1966171168
      %v426 = vunpack.c.0.s8 %v425
      %v427 = vlaneseq
      %v428 = vshrl.u32 %v427, 7
      %v429 = vsub.s32 %v426, %v428
      %v430 = vrot.slane %v414, %v429
      %v432 = vunpack.c.l.s4 1966171168
      %v433 = vunpack.c.0.s8 %v432
      %v434 = vlaneseq
      %v435 = vshrl.u32 %v434, 7
      %v436 = vsub.s32 %v433, %v435
      %v437 = vrot.slane %v421, %v436
      %v439 = vunpack.c.l.s4 1966171168
      %v440 = vunpack.c.0.s8 %v439
      %v441 = vlaneseq
      %v442 = vshrl.u32 %v441, 7
      %v443 = vsub.s32 %v440, %v442
      %v444 = vrot.slane %v422, %v443
      %v446 = vunpack.c.l.s4 1966171168
      %v447 = vunpack.c.0.s8 %v446
      %v448 = vlaneseq
      %v449 = vshrl.u32 %v448, 7
      %v450 = vsub.s32 %v447, %v449
      %v451 = vrot.slane %v423, %v450
      %v452 = vcombine.high %v430, %v430
      %v453 = vcombine.high %v437, %v437
      %v454 = vcombine.high %v444, %v444
      %v455 = vcombine.high %v451, %v451
      %v456 = vcombine.high %v400, %v400
      %v458 = vunpack.c.l.s4 1966171168
      %v459 = vunpack.c.0.s8 %v458
      %v460 = vlaneseq
      %v461 = vshrl.u32 %v460, 7
      %v462 = vsub.s32 %v459, %v461
      %v463 = vrot.slane %v400, %v462
      %v465 = vunpack.c.l.s4 1966171168
      %v466 = vunpack.c.0.s8 %v465
      %v467 = vlaneseq
      %v468 = vshrl.u32 %v467, 7
      %v469 = vsub.s32 %v466, %v468
      %v470 = vrot.slane %v456, %v469
      %v471 = vcombine.high %v463, %v463
      %v472 = vcombine.high %v470, %v470
      %v474 = vunpack.c.l.s4 1966171168
      %v475 = vunpack.c.0.s8 %v474
      %v476 = vlaneseq
      %v477 = vshrl.u32 %v476, 7
      %v478 = vsub.s32 %v475, %v477
      %v479 = vrot.slane %v463, %v478
      %v481 = vunpack.c.l.s4 1966171168
      %v482 = vunpack.c.0.s8 %v481
      %v483 = vlaneseq
      %v484 = vshrl.u32 %v483, 7
      %v485 = vsub.s32 %v482, %v484
      %v486 = vrot.slane %v470, %v485
      %v488 = vunpack.c.l.s4 1966171168
      %v489 = vunpack.c.0.s8 %v488
      %v490 = vlaneseq
      %v491 = vshrl.u32 %v490, 7
      %v492 = vsub.s32 %v489, %v491
      %v493 = vrot.slane %v471, %v492
      %v495 = vunpack.c.l.s4 1966171168
      %v496 = vunpack.c.0.s8 %v495
      %v497 = vlaneseq
      %v498 = vshrl.u32 %v497, 7
      %v499 = vsub.s32 %v496, %v498
      %v500 = vrot.slane %v472, %v499
      %v501 = vcombine.high %v479, %v479
      %v502 = vcombine.high %v486, %v486
      %v503 = vcombine.high %v493, %v493
      %v504 = vcombine.high %v500, %v500
      %vm505 = vcmask 261120
      %v506 = vsel %vm505, %v430, 0
      %v509 = vsel %vm505, %v311, 0
      %511 = vmatprep.subr.mxu0 0.0
      %512 = vmatpush1.xpose.msra.mxu0 0.0
      %513 = vmatprep.subr.mxu0 0.0
      %514 = vmatpush1.xpose.msra.mxu0 0.0
      %515 = vmatprep.subr.mxu0 0.0
      %516 = vmatpush1.xpose.msra.mxu0 0.0
      %517 = vmatprep.subr.mxu0 0.0
      %518 = vmatpush1.xpose.msra.mxu0 0.0
      %519 = vmatprep.subr.mxu0 0.0
      %520 = vmatpush1.xpose.msra.mxu0 0.0
      %521 = vmatprep.subr.mxu0 0.0
      %522 = vmatpush1.xpose.msra.mxu0 0.0
      %523 = vmatprep.subr.mxu0 0.0
      %524 = vmatpush1.xpose.msra.mxu0 0.0
      %525 = vmatprep.subr.mxu0 0.0
      %526 = vmatpush1.xpose.msra.mxu0 0.0
      %527 = vmatprep.subr.mxu0 0.0
      %528 = vmatpush1.xpose.msra.mxu0 0.0
      %529 = vmatprep.subr.mxu0 0.0
      %530 = vmatpush1.xpose.msra.mxu0 0.0
      %531 = vmatprep.subr.mxu0 0.0
      %532 = vmatpush1.xpose.msra.mxu0 0.0
      %533 = vmatprep.subr.mxu0 0.0
      %534 = vmatpush1.xpose.msra.mxu0 0.0
      %535 = vmatprep.subr.mxu0 0.0
      %536 = vmatpush1.xpose.msra.mxu0 0.0
      %537 = vmatprep.subr.mxu0 0.0
      %538 = vmatpush1.xpose.msra.mxu0 0.0
      %539 = vmatprep.subr.mxu0 0.0
      %540 = vmatpush1.xpose.msra.mxu0 0.0
      %541 = vmatprep.subr.mxu0 0.0
      %542 = vmatpush1.xpose.msra.mxu0 %v509
      %543 = vmatprep.subr.mxu0 0.0
      %544 = vmatpush2.xpose.msra.mxu0 0.0
      %545 = vmatprep.subr.mxu0 0.0
      %546 = vmatpush2.xpose.msra.mxu0 0.0
      %547 = vmatprep.subr.mxu0 0.0
      %548 = vmatpush2.xpose.msra.mxu0 0.0
      %549 = vmatprep.subr.mxu0 0.0
      %550 = vmatpush2.xpose.msra.mxu0 0.0
      %551 = vmatprep.subr.mxu0 0.0
      %552 = vmatpush2.xpose.msra.mxu0 0.0
      %553 = vmatprep.subr.mxu0 0.0
      %554 = vmatpush2.xpose.msra.mxu0 0.0
      %555 = vmatprep.subr.mxu0 0.0
      %556 = vmatpush2.xpose.msra.mxu0 0.0
      %557 = vmatprep.subr.mxu0 0.0
      %558 = vmatpush2.xpose.msra.mxu0 0.0
      %559 = vmatprep.subr.mxu0 0.0
      %560 = vmatpush2.xpose.msra.mxu0 0.0
      %561 = vmatprep.subr.mxu0 0.0
      %562 = vmatpush2.xpose.msra.mxu0 0.0
      %563 = vmatprep.subr.mxu0 0.0
      %564 = vmatpush2.xpose.msra.mxu0 0.0
      %565 = vmatprep.subr.mxu0 0.0
      %566 = vmatpush2.xpose.msra.mxu0 0.0
      %567 = vmatprep.subr.mxu0 0.0
      %568 = vmatpush2.xpose.msra.mxu0 0.0
      %569 = vmatprep.subr.mxu0 0.0
      %570 = vmatpush2.xpose.msra.mxu0 0.0
      %571 = vmatprep.subr.mxu0 0.0
      %572 = vmatpush2.xpose.msra.mxu0 0.0
      %573 = vmatprep.subr.mxu0 0.0
      %574 = vmatpush2.xpose.msra.mxu0 0.0
      %575 = vmatprep.mubr.f32.mxu0 0.0
      %576 = vmatmul.mubr.f32.gmra.mxu0 %v506
      %v577 = vpop.f32.mrf.mxu0
      %v578 = vadd.f32 0.0, %v577
      %v579 = vpop.f32.mrf.mxu0
      %580 = vdwg.mxu0
      %v581 = vsel %vm505, %v444, 0
      %v584 = vsel %vm505, %v312, 0
      %586 = vmatprep.subr.mxu0 0.0
      %587 = vmatpush1.xpose.msra.mxu0 0.0
      %588 = vmatprep.subr.mxu0 0.0
      %589 = vmatpush1.xpose.msra.mxu0 0.0
      %590 = vmatprep.subr.mxu0 0.0
      %591 = vmatpush1.xpose.msra.mxu0 0.0
      %592 = vmatprep.subr.mxu0 0.0
      %593 = vmatpush1.xpose.msra.mxu0 0.0
      %594 = vmatprep.subr.mxu0 0.0
      %595 = vmatpush1.xpose.msra.mxu0 0.0
      %596 = vmatprep.subr.mxu0 0.0
      %597 = vmatpush1.xpose.msra.mxu0 0.0
      %598 = vmatprep.subr.mxu0 0.0
      %599 = vmatpush1.xpose.msra.mxu0 0.0
      %600 = vmatprep.subr.mxu0 0.0
      %601 = vmatpush1.xpose.msra.mxu0 0.0
      %602 = vmatprep.subr.mxu0 0.0
      %603 = vmatpush1.xpose.msra.mxu0 0.0
      %604 = vmatprep.subr.mxu0 0.0
      %605 = vmatpush1.xpose.msra.mxu0 0.0
      %606 = vmatprep.subr.mxu0 0.0
      %607 = vmatpush1.xpose.msra.mxu0 0.0
      %608 = vmatprep.subr.mxu0 0.0
      %609 = vmatpush1.xpose.msra.mxu0 0.0
      %610 = vmatprep.subr.mxu0 0.0
      %611 = vmatpush1.xpose.msra.mxu0 0.0
      %612 = vmatprep.subr.mxu0 0.0
      %613 = vmatpush1.xpose.msra.mxu0 0.0
      %614 = vmatprep.subr.mxu0 0.0
      %615 = vmatpush1.xpose.msra.mxu0 0.0
      %616 = vmatprep.subr.mxu0 0.0
      %617 = vmatpush1.xpose.msra.mxu0 %v584
      %618 = vmatprep.subr.mxu0 0.0
      %619 = vmatpush2.xpose.msra.mxu0 0.0
      %620 = vmatprep.subr.mxu0 0.0
      %621 = vmatpush2.xpose.msra.mxu0 0.0
      %622 = vmatprep.subr.mxu0 0.0
      %623 = vmatpush2.xpose.msra.mxu0 0.0
      %624 = vmatprep.subr.mxu0 0.0
      %625 = vmatpush2.xpose.msra.mxu0 0.0
      %626 = vmatprep.subr.mxu0 0.0
      %627 = vmatpush2.xpose.msra.mxu0 0.0
      %628 = vmatprep.subr.mxu0 0.0
      %629 = vmatpush2.xpose.msra.mxu0 0.0
      %630 = vmatprep.subr.mxu0 0.0
      %631 = vmatpush2.xpose.msra.mxu0 0.0
      %632 = vmatprep.subr.mxu0 0.0
      %633 = vmatpush2.xpose.msra.mxu0 0.0
      %634 = vmatprep.subr.mxu0 0.0
      %635 = vmatpush2.xpose.msra.mxu0 0.0
      %636 = vmatprep.subr.mxu0 0.0
      %637 = vmatpush2.xpose.msra.mxu0 0.0
      %638 = vmatprep.subr.mxu0 0.0
      %639 = vmatpush2.xpose.msra.mxu0 0.0
      %640 = vmatprep.subr.mxu0 0.0
      %641 = vmatpush2.xpose.msra.mxu0 0.0
      %642 = vmatprep.subr.mxu0 0.0
      %643 = vmatpush2.xpose.msra.mxu0 0.0
      %644 = vmatprep.subr.mxu0 0.0
      %645 = vmatpush2.xpose.msra.mxu0 0.0
      %646 = vmatprep.subr.mxu0 0.0
      %647 = vmatpush2.xpose.msra.mxu0 0.0
      %648 = vmatprep.subr.mxu0 0.0
      %649 = vmatpush2.xpose.msra.mxu0 0.0
      %650 = vmatprep.mubr.f32.mxu0 0.0
      %651 = vmatmul.mubr.f32.gmra.mxu0 %v581
      %v652 = vpop.f32.mrf.mxu0
      %v653 = vadd.f32 0.0, %v652
      %v654 = vpop.f32.mrf.mxu0
      %655 = vdwg.mxu0
      %v656 = vsel %vm505, %v452, 0
      %v659 = vsel %vm505, %v313, 0
      %661 = vmatprep.subr.mxu0 0.0
      %662 = vmatpush1.xpose.msra.mxu0 0.0
      %663 = vmatprep.subr.mxu0 0.0
      %664 = vmatpush1.xpose.msra.mxu0 0.0
      %665 = vmatprep.subr.mxu0 0.0
      %666 = vmatpush1.xpose.msra.mxu0 0.0
      %667 = vmatprep.subr.mxu0 0.0
      %668 = vmatpush1.xpose.msra.mxu0 0.0
      %669 = vmatprep.subr.mxu0 0.0
      %670 = vmatpush1.xpose.msra.mxu0 0.0
      %671 = vmatprep.subr.mxu0 0.0
      %672 = vmatpush1.xpose.msra.mxu0 0.0
      %673 = vmatprep.subr.mxu0 0.0
      %674 = vmatpush1.xpose.msra.mxu0 0.0
      %675 = vmatprep.subr.mxu0 0.0
      %676 = vmatpush1.xpose.msra.mxu0 0.0
      %677 = vmatprep.subr.mxu0 0.0
      %678 = vmatpush1.xpose.msra.mxu0 0.0
      %679 = vmatprep.subr.mxu0 0.0
      %680 = vmatpush1.xpose.msra.mxu0 0.0
      %681 = vmatprep.subr.mxu0 0.0
      %682 = vmatpush1.xpose.msra.mxu0 0.0
      %683 = vmatprep.subr.mxu0 0.0
      %684 = vmatpush1.xpose.msra.mxu0 0.0
      %685 = vmatprep.subr.mxu0 0.0
      %686 = vmatpush1.xpose.msra.mxu0 0.0
      %687 = vmatprep.subr.mxu0 0.0
      %688 = vmatpush1.xpose.msra.mxu0 0.0
      %689 = vmatprep.subr.mxu0 0.0
      %690 = vmatpush1.xpose.msra.mxu0 0.0
      %691 = vmatprep.subr.mxu0 0.0
      %692 = vmatpush1.xpose.msra.mxu0 %v659
      %693 = vmatprep.subr.mxu0 0.0
      %694 = vmatpush2.xpose.msra.mxu0 0.0
      %695 = vmatprep.subr.mxu0 0.0
      %696 = vmatpush2.xpose.msra.mxu0 0.0
      %697 = vmatprep.subr.mxu0 0.0
      %698 = vmatpush2.xpose.msra.mxu0 0.0
      %699 = vmatprep.subr.mxu0 0.0
      %700 = vmatpush2.xpose.msra.mxu0 0.0
      %701 = vmatprep.subr.mxu0 0.0
      %702 = vmatpush2.xpose.msra.mxu0 0.0
      %703 = vmatprep.subr.mxu0 0.0
      %704 = vmatpush2.xpose.msra.mxu0 0.0
      %705 = vmatprep.subr.mxu0 0.0
      %706 = vmatpush2.xpose.msra.mxu0 0.0
      %707 = vmatprep.subr.mxu0 0.0
      %708 = vmatpush2.xpose.msra.mxu0 0.0
      %709 = vmatprep.subr.mxu0 0.0
      %710 = vmatpush2.xpose.msra.mxu0 0.0
      %711 = vmatprep.subr.mxu0 0.0
      %712 = vmatpush2.xpose.msra.mxu0 0.0
      %713 = vmatprep.subr.mxu0 0.0
      %714 = vmatpush2.xpose.msra.mxu0 0.0
      %715 = vmatprep.subr.mxu0 0.0
      %716 = vmatpush2.xpose.msra.mxu0 0.0
      %717 = vmatprep.subr.mxu0 0.0
      %718 = vmatpush2.xpose.msra.mxu0 0.0
      %719 = vmatprep.subr.mxu0 0.0
      %720 = vmatpush2.xpose.msra.mxu0 0.0
      %721 = vmatprep.subr.mxu0 0.0
      %722 = vmatpush2.xpose.msra.mxu0 0.0
      %723 = vmatprep.subr.mxu0 0.0
      %724 = vmatpush2.xpose.msra.mxu0 0.0
      %725 = vmatprep.mubr.f32.mxu0 0.0
      %726 = vmatmul.mubr.f32.gmra.mxu0 %v656
      %v727 = vpop.f32.mrf.mxu0
      %v728 = vadd.f32 0.0, %v727
      %v729 = vpop.f32.mrf.mxu0
      %730 = vdwg.mxu0
      %v731 = vsel %vm505, %v454, 0
      %v734 = vsel %vm505, %v314, 0
      %736 = vmatprep.subr.mxu0 0.0
      %737 = vmatpush1.xpose.msra.mxu0 0.0
      %738 = vmatprep.subr.mxu0 0.0
      %739 = vmatpush1.xpose.msra.mxu0 0.0
      %740 = vmatprep.subr.mxu0 0.0
      %741 = vmatpush1.xpose.msra.mxu0 0.0
      %742 = vmatprep.subr.mxu0 0.0
      %743 = vmatpush1.xpose.msra.mxu0 0.0
      %744 = vmatprep.subr.mxu0 0.0
      %745 = vmatpush1.xpose.msra.mxu0 0.0
      %746 = vmatprep.subr.mxu0 0.0
      %747 = vmatpush1.xpose.msra.mxu0 0.0
      %748 = vmatprep.subr.mxu0 0.0
      %749 = vmatpush1.xpose.msra.mxu0 0.0
      %750 = vmatprep.subr.mxu0 0.0
      %751 = vmatpush1.xpose.msra.mxu0 0.0
      %752 = vmatprep.subr.mxu0 0.0
      %753 = vmatpush1.xpose.msra.mxu0 0.0
      %754 = vmatprep.subr.mxu0 0.0
      %755 = vmatpush1.xpose.msra.mxu0 0.0
      %756 = vmatprep.subr.mxu0 0.0
      %757 = vmatpush1.xpose.msra.mxu0 0.0
      %758 = vmatprep.subr.mxu0 0.0
      %759 = vmatpush1.xpose.msra.mxu0 0.0
      %760 = vmatprep.subr.mxu0 0.0
      %761 = vmatpush1.xpose.msra.mxu0 0.0
      %762 = vmatprep.subr.mxu0 0.0
      %763 = vmatpush1.xpose.msra.mxu0 0.0
      %764 = vmatprep.subr.mxu0 0.0
      %765 = vmatpush1.xpose.msra.mxu0 0.0
      %766 = vmatprep.subr.mxu0 0.0
      %767 = vmatpush1.xpose.msra.mxu0 %v734
      %768 = vmatprep.subr.mxu0 0.0
      %769 = vmatpush2.xpose.msra.mxu0 0.0
      %770 = vmatprep.subr.mxu0 0.0
      %771 = vmatpush2.xpose.msra.mxu0 0.0
      %772 = vmatprep.subr.mxu0 0.0
      %773 = vmatpush2.xpose.msra.mxu0 0.0
      %774 = vmatprep.subr.mxu0 0.0
      %775 = vmatpush2.xpose.msra.mxu0 0.0
      %776 = vmatprep.subr.mxu0 0.0
      %777 = vmatpush2.xpose.msra.mxu0 0.0
      %778 = vmatprep.subr.mxu0 0.0
      %779 = vmatpush2.xpose.msra.mxu0 0.0
      %780 = vmatprep.subr.mxu0 0.0
      %781 = vmatpush2.xpose.msra.mxu0 0.0
      %782 = vmatprep.subr.mxu0 0.0
      %783 = vmatpush2.xpose.msra.mxu0 0.0
      %784 = vmatprep.subr.mxu0 0.0
      %785 = vmatpush2.xpose.msra.mxu0 0.0
      %786 = vmatprep.subr.mxu0 0.0
      %787 = vmatpush2.xpose.msra.mxu0 0.0
      %788 = vmatprep.subr.mxu0 0.0
      %789 = vmatpush2.xpose.msra.mxu0 0.0
      %790 = vmatprep.subr.mxu0 0.0
      %791 = vmatpush2.xpose.msra.mxu0 0.0
      %792 = vmatprep.subr.mxu0 0.0
      %793 = vmatpush2.xpose.msra.mxu0 0.0
      %794 = vmatprep.subr.mxu0 0.0
      %795 = vmatpush2.xpose.msra.mxu0 0.0
      %796 = vmatprep.subr.mxu0 0.0
      %797 = vmatpush2.xpose.msra.mxu0 0.0
      %798 = vmatprep.subr.mxu0 0.0
      %799 = vmatpush2.xpose.msra.mxu0 0.0
      %800 = vmatprep.mubr.f32.mxu0 0.0
      %801 = vmatmul.mubr.f32.gmra.mxu0 %v731
      %v802 = vpop.f32.mrf.mxu0
      %v803 = vadd.f32 0.0, %v802
      %v804 = vpop.f32.mrf.mxu0
      %805 = vdwg.mxu0
      %v806 = vsel %vm505, %v437, 0
      %v809 = vsel %vm505, %v315, 0
      %811 = vmatprep.subr.mxu0 0.0
      %812 = vmatpush1.xpose.msra.mxu0 0.0
      %813 = vmatprep.subr.mxu0 0.0
      %814 = vmatpush1.xpose.msra.mxu0 0.0
      %815 = vmatprep.subr.mxu0 0.0
      %816 = vmatpush1.xpose.msra.mxu0 0.0
      %817 = vmatprep.subr.mxu0 0.0
      %818 = vmatpush1.xpose.msra.mxu0 0.0
      %819 = vmatprep.subr.mxu0 0.0
      %820 = vmatpush1.xpose.msra.mxu0 0.0
      %821 = vmatprep.subr.mxu0 0.0
      %822 = vmatpush1.xpose.msra.mxu0 0.0
      %823 = vmatprep.subr.mxu0 0.0
      %824 = vmatpush1.xpose.msra.mxu0 0.0
      %825 = vmatprep.subr.mxu0 0.0
      %826 = vmatpush1.xpose.msra.mxu0 0.0
      %827 = vmatprep.subr.mxu0 0.0
      %828 = vmatpush1.xpose.msra.mxu0 0.0
      %829 = vmatprep.subr.mxu0 0.0
      %830 = vmatpush1.xpose.msra.mxu0 0.0
      %831 = vmatprep.subr.mxu0 0.0
      %832 = vmatpush1.xpose.msra.mxu0 0.0
      %833 = vmatprep.subr.mxu0 0.0
      %834 = vmatpush1.xpose.msra.mxu0 0.0
      %835 = vmatprep.subr.mxu0 0.0
      %836 = vmatpush1.xpose.msra.mxu0 0.0
      %837 = vmatprep.subr.mxu0 0.0
      %838 = vmatpush1.xpose.msra.mxu0 0.0
      %839 = vmatprep.subr.mxu0 0.0
      %840 = vmatpush1.xpose.msra.mxu0 0.0
      %841 = vmatprep.subr.mxu0 0.0
      %842 = vmatpush1.xpose.msra.mxu0 %v809
      %843 = vmatprep.subr.mxu0 0.0
      %844 = vmatpush2.xpose.msra.mxu0 0.0
      %845 = vmatprep.subr.mxu0 0.0
      %846 = vmatpush2.xpose.msra.mxu0 0.0
      %847 = vmatprep.subr.mxu0 0.0
      %848 = vmatpush2.xpose.msra.mxu0 0.0
      %849 = vmatprep.subr.mxu0 0.0
      %850 = vmatpush2.xpose.msra.mxu0 0.0
      %851 = vmatprep.subr.mxu0 0.0
      %852 = vmatpush2.xpose.msra.mxu0 0.0
      %853 = vmatprep.subr.mxu0 0.0
      %854 = vmatpush2.xpose.msra.mxu0 0.0
      %855 = vmatprep.subr.mxu0 0.0
      %856 = vmatpush2.xpose.msra.mxu0 0.0
      %857 = vmatprep.subr.mxu0 0.0
      %858 = vmatpush2.xpose.msra.mxu0 0.0
      %859 = vmatprep.subr.mxu0 0.0
      %860 = vmatpush2.xpose.msra.mxu0 0.0
      %861 = vmatprep.subr.mxu0 0.0
      %862 = vmatpush2.xpose.msra.mxu0 0.0
      %863 = vmatprep.subr.mxu0 0.0
      %864 = vmatpush2.xpose.msra.mxu0 0.0
      %865 = vmatprep.subr.mxu0 0.0
      %866 = vmatpush2.xpose.msra.mxu0 0.0
      %867 = vmatprep.subr.mxu0 0.0
      %868 = vmatpush2.xpose.msra.mxu0 0.0
      %869 = vmatprep.subr.mxu0 0.0
      %870 = vmatpush2.xpose.msra.mxu0 0.0
      %871 = vmatprep.subr.mxu0 0.0
      %872 = vmatpush2.xpose.msra.mxu0 0.0
      %873 = vmatprep.subr.mxu0 0.0
      %874 = vmatpush2.xpose.msra.mxu0 0.0
      %875 = vmatprep.mubr.f32.mxu0 0.0
      %876 = vmatmul.mubr.f32.gmra.mxu0 %v806
      %v877 = vpop.f32.mrf.mxu0
      %v878 = vadd.f32 0.0, %v877
      %v879 = vpop.f32.mrf.mxu0
      %880 = vdwg.mxu0
      %v881 = vsel %vm505, %v451, 0
      %v884 = vsel %vm505, %v316, 0
      %886 = vmatprep.subr.mxu0 0.0
      %887 = vmatpush1.xpose.msra.mxu0 0.0
      %888 = vmatprep.subr.mxu0 0.0
      %889 = vmatpush1.xpose.msra.mxu0 0.0
      %890 = vmatprep.subr.mxu0 0.0
      %891 = vmatpush1.xpose.msra.mxu0 0.0
      %892 = vmatprep.subr.mxu0 0.0
      %893 = vmatpush1.xpose.msra.mxu0 0.0
      %894 = vmatprep.subr.mxu0 0.0
      %895 = vmatpush1.xpose.msra.mxu0 0.0
      %896 = vmatprep.subr.mxu0 0.0
      %897 = vmatpush1.xpose.msra.mxu0 0.0
      %898 = vmatprep.subr.mxu0 0.0
      %899 = vmatpush1.xpose.msra.mxu0 0.0
      %900 = vmatprep.subr.mxu0 0.0
      %901 = vmatpush1.xpose.msra.mxu0 0.0
      %902 = vmatprep.subr.mxu0 0.0
      %903 = vmatpush1.xpose.msra.mxu0 0.0
      %904 = vmatprep.subr.mxu0 0.0
      %905 = vmatpush1.xpose.msra.mxu0 0.0
      %906 = vmatprep.subr.mxu0 0.0
      %907 = vmatpush1.xpose.msra.mxu0 0.0
      %908 = vmatprep.subr.mxu0 0.0
      %909 = vmatpush1.xpose.msra.mxu0 0.0
      %910 = vmatprep.subr.mxu0 0.0
      %911 = vmatpush1.xpose.msra.mxu0 0.0
      %912 = vmatprep.subr.mxu0 0.0
      %913 = vmatpush1.xpose.msra.mxu0 0.0
      %914 = vmatprep.subr.mxu0 0.0
      %915 = vmatpush1.xpose.msra.mxu0 0.0
      %916 = vmatprep.subr.mxu0 0.0
      %917 = vmatpush1.xpose.msra.mxu0 %v884
      %918 = vmatprep.subr.mxu0 0.0
      %919 = vmatpush2.xpose.msra.mxu0 0.0
      %920 = vmatprep.subr.mxu0 0.0
      %921 = vmatpush2.xpose.msra.mxu0 0.0
      %922 = vmatprep.subr.mxu0 0.0
      %923 = vmatpush2.xpose.msra.mxu0 0.0
      %924 = vmatprep.subr.mxu0 0.0
      %925 = vmatpush2.xpose.msra.mxu0 0.0
      %926 = vmatprep.subr.mxu0 0.0
      %927 = vmatpush2.xpose.msra.mxu0 0.0
      %928 = vmatprep.subr.mxu0 0.0
      %929 = vmatpush2.xpose.msra.mxu0 0.0
      %930 = vmatprep.subr.mxu0 0.0
      %931 = vmatpush2.xpose.msra.mxu0 0.0
      %932 = vmatprep.subr.mxu0 0.0
      %933 = vmatpush2.xpose.msra.mxu0 0.0
      %934 = vmatprep.subr.mxu0 0.0
      %935 = vmatpush2.xpose.msra.mxu0 0.0
      %936 = vmatprep.subr.mxu0 0.0
      %937 = vmatpush2.xpose.msra.mxu0 0.0
      %938 = vmatprep.subr.mxu0 0.0
      %939 = vmatpush2.xpose.msra.mxu0 0.0
      %940 = vmatprep.subr.mxu0 0.0
      %941 = vmatpush2.xpose.msra.mxu0 0.0
      %942 = vmatprep.subr.mxu0 0.0
      %943 = vmatpush2.xpose.msra.mxu0 0.0
      %944 = vmatprep.subr.mxu0 0.0
      %945 = vmatpush2.xpose.msra.mxu0 0.0
      %946 = vmatprep.subr.mxu0 0.0
      %947 = vmatpush2.xpose.msra.mxu0 0.0
      %948 = vmatprep.subr.mxu0 0.0
      %949 = vmatpush2.xpose.msra.mxu0 0.0
      %950 = vmatprep.mubr.f32.mxu0 0.0
      %951 = vmatmul.mubr.f32.gmra.mxu0 %v881
      %v952 = vpop.f32.mrf.mxu0
      %v953 = vadd.f32 0.0, %v952
      %v954 = vpop.f32.mrf.mxu0
      %955 = vdwg.mxu0
      %v956 = vsel %vm505, %v453, 0
      %v959 = vsel %vm505, %v317, 0
      %961 = vmatprep.subr.mxu0 0.0
      %962 = vmatpush1.xpose.msra.mxu0 0.0
      %963 = vmatprep.subr.mxu0 0.0
      %964 = vmatpush1.xpose.msra.mxu0 0.0
      %965 = vmatprep.subr.mxu0 0.0
      %966 = vmatpush1.xpose.msra.mxu0 0.0
      %967 = vmatprep.subr.mxu0 0.0
      %968 = vmatpush1.xpose.msra.mxu0 0.0
      %969 = vmatprep.subr.mxu0 0.0
      %970 = vmatpush1.xpose.msra.mxu0 0.0
      %971 = vmatprep.subr.mxu0 0.0
      %972 = vmatpush1.xpose.msra.mxu0 0.0
      %973 = vmatprep.subr.mxu0 0.0
      %974 = vmatpush1.xpose.msra.mxu0 0.0
      %975 = vmatprep.subr.mxu0 0.0
      %976 = vmatpush1.xpose.msra.mxu0 0.0
      %977 = vmatprep.subr.mxu0 0.0
      %978 = vmatpush1.xpose.msra.mxu0 0.0
      %979 = vmatprep.subr.mxu0 0.0
      %980 = vmatpush1.xpose.msra.mxu0 0.0
      %981 = vmatprep.subr.mxu0 0.0
      %982 = vmatpush1.xpose.msra.mxu0 0.0
      %983 = vmatprep.subr.mxu0 0.0
      %984 = vmatpush1.xpose.msra.mxu0 0.0
      %985 = vmatprep.subr.mxu0 0.0
      %986 = vmatpush1.xpose.msra.mxu0 0.0
      %987 = vmatprep.subr.mxu0 0.0
      %988 = vmatpush1.xpose.msra.mxu0 0.0
      %989 = vmatprep.subr.mxu0 0.0
      %990 = vmatpush1.xpose.msra.mxu0 0.0
      %991 = vmatprep.subr.mxu0 0.0
      %992 = vmatpush1.xpose.msra.mxu0 %v959
      %993 = vmatprep.subr.mxu0 0.0
      %994 = vmatpush2.xpose.msra.mxu0 0.0
      %995 = vmatprep.subr.mxu0 0.0
      %996 = vmatpush2.xpose.msra.mxu0 0.0
      %997 = vmatprep.subr.mxu0 0.0
      %998 = vmatpush2.xpose.msra.mxu0 0.0
      %999 = vmatprep.subr.mxu0 0.0
      %1000 = vmatpush2.xpose.msra.mxu0 0.0
      %1001 = vmatprep.subr.mxu0 0.0
      %1002 = vmatpush2.xpose.msra.mxu0 0.0
      %1003 = vmatprep.subr.mxu0 0.0
      %1004 = vmatpush2.xpose.msra.mxu0 0.0
      %1005 = vmatprep.subr.mxu0 0.0
      %1006 = vmatpush2.xpose.msra.mxu0 0.0
      %1007 = vmatprep.subr.mxu0 0.0
      %1008 = vmatpush2.xpose.msra.mxu0 0.0
      %1009 = vmatprep.subr.mxu0 0.0
      %1010 = vmatpush2.xpose.msra.mxu0 0.0
      %1011 = vmatprep.subr.mxu0 0.0
      %1012 = vmatpush2.xpose.msra.mxu0 0.0
      %1013 = vmatprep.subr.mxu0 0.0
      %1014 = vmatpush2.xpose.msra.mxu0 0.0
      %1015 = vmatprep.subr.mxu0 0.0
      %1016 = vmatpush2.xpose.msra.mxu0 0.0
      %1017 = vmatprep.subr.mxu0 0.0
      %1018 = vmatpush2.xpose.msra.mxu0 0.0
      %1019 = vmatprep.subr.mxu0 0.0
      %1020 = vmatpush2.xpose.msra.mxu0 0.0
      %1021 = vmatprep.subr.mxu0 0.0
      %1022 = vmatpush2.xpose.msra.mxu0 0.0
      %1023 = vmatprep.subr.mxu0 0.0
      %1024 = vmatpush2.xpose.msra.mxu0 0.0
      %1025 = vmatprep.mubr.f32.mxu0 0.0
      %1026 = vmatmul.mubr.f32.gmra.mxu0 %v956
      %v1027 = vpop.f32.mrf.mxu0
      %v1028 = vadd.f32 0.0, %v1027
      %v1029 = vpop.f32.mrf.mxu0
      %1030 = vdwg.mxu0
      %v1031 = vsel %vm505, %v455, 0
      %v1034 = vsel %vm505, %v318, 0
      %1036 = vmatprep.subr.mxu0 0.0
      %1037 = vmatpush1.xpose.msra.mxu0 0.0
      %1038 = vmatprep.subr.mxu0 0.0
      %1039 = vmatpush1.xpose.msra.mxu0 0.0
      %1040 = vmatprep.subr.mxu0 0.0
      %1041 = vmatpush1.xpose.msra.mxu0 0.0
      %1042 = vmatprep.subr.mxu0 0.0
      %1043 = vmatpush1.xpose.msra.mxu0 0.0
      %1044 = vmatprep.subr.mxu0 0.0
      %1045 = vmatpush1.xpose.msra.mxu0 0.0
      %1046 = vmatprep.subr.mxu0 0.0
      %1047 = vmatpush1.xpose.msra.mxu0 0.0
      %1048 = vmatprep.subr.mxu0 0.0
      %1049 = vmatpush1.xpose.msra.mxu0 0.0
      %1050 = vmatprep.subr.mxu0 0.0
      %1051 = vmatpush1.xpose.msra.mxu0 0.0
      %1052 = vmatprep.subr.mxu0 0.0
      %1053 = vmatpush1.xpose.msra.mxu0 0.0
      %1054 = vmatprep.subr.mxu0 0.0
      %1055 = vmatpush1.xpose.msra.mxu0 0.0
      %1056 = vmatprep.subr.mxu0 0.0
      %1057 = vmatpush1.xpose.msra.mxu0 0.0
      %1058 = vmatprep.subr.mxu0 0.0
      %1059 = vmatpush1.xpose.msra.mxu0 0.0
      %1060 = vmatprep.subr.mxu0 0.0
      %1061 = vmatpush1.xpose.msra.mxu0 0.0
      %1062 = vmatprep.subr.mxu0 0.0
      %1063 = vmatpush1.xpose.msra.mxu0 0.0
      %1064 = vmatprep.subr.mxu0 0.0
      %1065 = vmatpush1.xpose.msra.mxu0 0.0
      %1066 = vmatprep.subr.mxu0 0.0
      %1067 = vmatpush1.xpose.msra.mxu0 %v1034
      %1068 = vmatprep.subr.mxu0 0.0
      %1069 = vmatpush2.xpose.msra.mxu0 0.0
      %1070 = vmatprep.subr.mxu0 0.0
      %1071 = vmatpush2.xpose.msra.mxu0 0.0
      %1072 = vmatprep.subr.mxu0 0.0
      %1073 = vmatpush2.xpose.msra.mxu0 0.0
      %1074 = vmatprep.subr.mxu0 0.0
      %1075 = vmatpush2.xpose.msra.mxu0 0.0
      %1076 = vmatprep.subr.mxu0 0.0
      %1077 = vmatpush2.xpose.msra.mxu0 0.0
      %1078 = vmatprep.subr.mxu0 0.0
      %1079 = vmatpush2.xpose.msra.mxu0 0.0
      %1080 = vmatprep.subr.mxu0 0.0
      %1081 = vmatpush2.xpose.msra.mxu0 0.0
      %1082 = vmatprep.subr.mxu0 0.0
      %1083 = vmatpush2.xpose.msra.mxu0 0.0
      %1084 = vmatprep.subr.mxu0 0.0
      %1085 = vmatpush2.xpose.msra.mxu0 0.0
      %1086 = vmatprep.subr.mxu0 0.0
      %1087 = vmatpush2.xpose.msra.mxu0 0.0
      %1088 = vmatprep.subr.mxu0 0.0
      %1089 = vmatpush2.xpose.msra.mxu0 0.0
      %1090 = vmatprep.subr.mxu0 0.0
      %1091 = vmatpush2.xpose.msra.mxu0 0.0
      %1092 = vmatprep.subr.mxu0 0.0
      %1093 = vmatpush2.xpose.msra.mxu0 0.0
      %1094 = vmatprep.subr.mxu0 0.0
      %1095 = vmatpush2.xpose.msra.mxu0 0.0
      %1096 = vmatprep.subr.mxu0 0.0
      %1097 = vmatpush2.xpose.msra.mxu0 0.0
      %1098 = vmatprep.subr.mxu0 0.0
      %1099 = vmatpush2.xpose.msra.mxu0 0.0
      %1100 = vmatprep.mubr.f32.mxu0 0.0
      %1101 = vmatmul.mubr.f32.gmra.mxu0 %v1031
      %v1102 = vpop.f32.mrf.mxu0
      %v1103 = vadd.f32 0.0, %v1102
      %v1104 = vpop.f32.mrf.mxu0
      %1105 = vdwg.mxu0
      %v1106 = vsel %vm505, %v479, 0
      %v1109 = vsel %vm505, %v319, 0
      %1111 = vmatprep.subr.mxu0 0.0
      %1112 = vmatpush1.xpose.msra.mxu0 0.0
      %1113 = vmatprep.subr.mxu0 0.0
      %1114 = vmatpush1.xpose.msra.mxu0 0.0
      %1115 = vmatprep.subr.mxu0 0.0
      %1116 = vmatpush1.xpose.msra.mxu0 0.0
      %1117 = vmatprep.subr.mxu0 0.0
      %1118 = vmatpush1.xpose.msra.mxu0 0.0
      %1119 = vmatprep.subr.mxu0 0.0
      %1120 = vmatpush1.xpose.msra.mxu0 0.0
      %1121 = vmatprep.subr.mxu0 0.0
      %1122 = vmatpush1.xpose.msra.mxu0 0.0
      %1123 = vmatprep.subr.mxu0 0.0
      %1124 = vmatpush1.xpose.msra.mxu0 0.0
      %1125 = vmatprep.subr.mxu0 0.0
      %1126 = vmatpush1.xpose.msra.mxu0 0.0
      %1127 = vmatprep.subr.mxu0 0.0
      %1128 = vmatpush1.xpose.msra.mxu0 0.0
      %1129 = vmatprep.subr.mxu0 0.0
      %1130 = vmatpush1.xpose.msra.mxu0 0.0
      %1131 = vmatprep.subr.mxu0 0.0
      %1132 = vmatpush1.xpose.msra.mxu0 0.0
      %1133 = vmatprep.subr.mxu0 0.0
      %1134 = vmatpush1.xpose.msra.mxu0 0.0
      %1135 = vmatprep.subr.mxu0 0.0
      %1136 = vmatpush1.xpose.msra.mxu0 0.0
      %1137 = vmatprep.subr.mxu0 0.0
      %1138 = vmatpush1.xpose.msra.mxu0 0.0
      %1139 = vmatprep.subr.mxu0 0.0
      %1140 = vmatpush1.xpose.msra.mxu0 0.0
      %1141 = vmatprep.subr.mxu0 0.0
      %1142 = vmatpush1.xpose.msra.mxu0 %v1109
      %1143 = vmatprep.subr.mxu0 0.0
      %1144 = vmatpush2.xpose.msra.mxu0 0.0
      %1145 = vmatprep.subr.mxu0 0.0
      %1146 = vmatpush2.xpose.msra.mxu0 0.0
      %1147 = vmatprep.subr.mxu0 0.0
      %1148 = vmatpush2.xpose.msra.mxu0 0.0
      %1149 = vmatprep.subr.mxu0 0.0
      %1150 = vmatpush2.xpose.msra.mxu0 0.0
      %1151 = vmatprep.subr.mxu0 0.0
      %1152 = vmatpush2.xpose.msra.mxu0 0.0
      %1153 = vmatprep.subr.mxu0 0.0
      %1154 = vmatpush2.xpose.msra.mxu0 0.0
      %1155 = vmatprep.subr.mxu0 0.0
      %1156 = vmatpush2.xpose.msra.mxu0 0.0
      %1157 = vmatprep.subr.mxu0 0.0
      %1158 = vmatpush2.xpose.msra.mxu0 0.0
      %1159 = vmatprep.subr.mxu0 0.0
      %1160 = vmatpush2.xpose.msra.mxu0 0.0
      %1161 = vmatprep.subr.mxu0 0.0
      %1162 = vmatpush2.xpose.msra.mxu0 0.0
      %1163 = vmatprep.subr.mxu0 0.0
      %1164 = vmatpush2.xpose.msra.mxu0 0.0
      %1165 = vmatprep.subr.mxu0 0.0
      %1166 = vmatpush2.xpose.msra.mxu0 0.0
      %1167 = vmatprep.subr.mxu0 0.0
      %1168 = vmatpush2.xpose.msra.mxu0 0.0
      %1169 = vmatprep.subr.mxu0 0.0
      %1170 = vmatpush2.xpose.msra.mxu0 0.0
      %1171 = vmatprep.subr.mxu0 0.0
      %1172 = vmatpush2.xpose.msra.mxu0 0.0
      %1173 = vmatprep.subr.mxu0 0.0
      %1174 = vmatpush2.xpose.msra.mxu0 0.0
      %1175 = vmatprep.mubr.f32.mxu0 0.0
      %1176 = vmatmul.mubr.f32.gmra.mxu0 %v1106
      %v1177 = vpop.f32.mrf.mxu0
      %v1178 = vadd.f32 0.0, %v1177
      %v1179 = vpop.f32.mrf.mxu0
      %1180 = vdwg.mxu0
      %v1181 = vsel %vm505, %v493, 0
      %v1184 = vsel %vm505, %v320, 0
      %1186 = vmatprep.subr.mxu0 0.0
      %1187 = vmatpush1.xpose.msra.mxu0 0.0
      %1188 = vmatprep.subr.mxu0 0.0
      %1189 = vmatpush1.xpose.msra.mxu0 0.0
      %1190 = vmatprep.subr.mxu0 0.0
      %1191 = vmatpush1.xpose.msra.mxu0 0.0
      %1192 = vmatprep.subr.mxu0 0.0
      %1193 = vmatpush1.xpose.msra.mxu0 0.0
      %1194 = vmatprep.subr.mxu0 0.0
      %1195 = vmatpush1.xpose.msra.mxu0 0.0
      %1196 = vmatprep.subr.mxu0 0.0
      %1197 = vmatpush1.xpose.msra.mxu0 0.0
      %1198 = vmatprep.subr.mxu0 0.0
      %1199 = vmatpush1.xpose.msra.mxu0 0.0
      %1200 = vmatprep.subr.mxu0 0.0
      %1201 = vmatpush1.xpose.msra.mxu0 0.0
      %1202 = vmatprep.subr.mxu0 0.0
      %1203 = vmatpush1.xpose.msra.mxu0 0.0
      %1204 = vmatprep.subr.mxu0 0.0
      %1205 = vmatpush1.xpose.msra.mxu0 0.0
      %1206 = vmatprep.subr.mxu0 0.0
      %1207 = vmatpush1.xpose.msra.mxu0 0.0
      %1208 = vmatprep.subr.mxu0 0.0
      %1209 = vmatpush1.xpose.msra.mxu0 0.0
      %1210 = vmatprep.subr.mxu0 0.0
      %1211 = vmatpush1.xpose.msra.mxu0 0.0
      %1212 = vmatprep.subr.mxu0 0.0
      %1213 = vmatpush1.xpose.msra.mxu0 0.0
      %1214 = vmatprep.subr.mxu0 0.0
      %1215 = vmatpush1.xpose.msra.mxu0 0.0
      %1216 = vmatprep.subr.mxu0 0.0
      %1217 = vmatpush1.xpose.msra.mxu0 %v1184
      %1218 = vmatprep.subr.mxu0 0.0
      %1219 = vmatpush2.xpose.msra.mxu0 0.0
      %1220 = vmatprep.subr.mxu0 0.0
      %1221 = vmatpush2.xpose.msra.mxu0 0.0
      %1222 = vmatprep.subr.mxu0 0.0
      %1223 = vmatpush2.xpose.msra.mxu0 0.0
      %1224 = vmatprep.subr.mxu0 0.0
      %1225 = vmatpush2.xpose.msra.mxu0 0.0
      %1226 = vmatprep.subr.mxu0 0.0
      %1227 = vmatpush2.xpose.msra.mxu0 0.0
      %1228 = vmatprep.subr.mxu0 0.0
      %1229 = vmatpush2.xpose.msra.mxu0 0.0
      %1230 = vmatprep.subr.mxu0 0.0
      %1231 = vmatpush2.xpose.msra.mxu0 0.0
      %1232 = vmatprep.subr.mxu0 0.0
      %1233 = vmatpush2.xpose.msra.mxu0 0.0
      %1234 = vmatprep.subr.mxu0 0.0
      %1235 = vmatpush2.xpose.msra.mxu0 0.0
      %1236 = vmatprep.subr.mxu0 0.0
      %1237 = vmatpush2.xpose.msra.mxu0 0.0
      %1238 = vmatprep.subr.mxu0 0.0
      %1239 = vmatpush2.xpose.msra.mxu0 0.0
      %1240 = vmatprep.subr.mxu0 0.0
      %1241 = vmatpush2.xpose.msra.mxu0 0.0
      %1242 = vmatprep.subr.mxu0 0.0
      %1243 = vmatpush2.xpose.msra.mxu0 0.0
      %1244 = vmatprep.subr.mxu0 0.0
      %1245 = vmatpush2.xpose.msra.mxu0 0.0
      %1246 = vmatprep.subr.mxu0 0.0
      %1247 = vmatpush2.xpose.msra.mxu0 0.0
      %1248 = vmatprep.subr.mxu0 0.0
      %1249 = vmatpush2.xpose.msra.mxu0 0.0
      %1250 = vmatprep.mubr.f32.mxu0 0.0
      %1251 = vmatmul.mubr.f32.gmra.mxu0 %v1181
      %v1252 = vpop.f32.mrf.mxu0
      %v1253 = vadd.f32 0.0, %v1252
      %v1254 = vpop.f32.mrf.mxu0
      %1255 = vdwg.mxu0
      %v1256 = vsel %vm505, %v501, 0
      %v1259 = vsel %vm505, %v321, 0
      %1261 = vmatprep.subr.mxu0 0.0
      %1262 = vmatpush1.xpose.msra.mxu0 0.0
      %1263 = vmatprep.subr.mxu0 0.0
      %1264 = vmatpush1.xpose.msra.mxu0 0.0
      %1265 = vmatprep.subr.mxu0 0.0
      %1266 = vmatpush1.xpose.msra.mxu0 0.0
      %1267 = vmatprep.subr.mxu0 0.0
      %1268 = vmatpush1.xpose.msra.mxu0 0.0
      %1269 = vmatprep.subr.mxu0 0.0
      %1270 = vmatpush1.xpose.msra.mxu0 0.0
      %1271 = vmatprep.subr.mxu0 0.0
      %1272 = vmatpush1.xpose.msra.mxu0 0.0
      %1273 = vmatprep.subr.mxu0 0.0
      %1274 = vmatpush1.xpose.msra.mxu0 0.0
      %1275 = vmatprep.subr.mxu0 0.0
      %1276 = vmatpush1.xpose.msra.mxu0 0.0
      %1277 = vmatprep.subr.mxu0 0.0
      %1278 = vmatpush1.xpose.msra.mxu0 0.0
      %1279 = vmatprep.subr.mxu0 0.0
      %1280 = vmatpush1.xpose.msra.mxu0 0.0
      %1281 = vmatprep.subr.mxu0 0.0
      %1282 = vmatpush1.xpose.msra.mxu0 0.0
      %1283 = vmatprep.subr.mxu0 0.0
      %1284 = vmatpush1.xpose.msra.mxu0 0.0
      %1285 = vmatprep.subr.mxu0 0.0
      %1286 = vmatpush1.xpose.msra.mxu0 0.0
      %1287 = vmatprep.subr.mxu0 0.0
      %1288 = vmatpush1.xpose.msra.mxu0 0.0
      %1289 = vmatprep.subr.mxu0 0.0
      %1290 = vmatpush1.xpose.msra.mxu0 0.0
      %1291 = vmatprep.subr.mxu0 0.0
      %1292 = vmatpush1.xpose.msra.mxu0 %v1259
      %1293 = vmatprep.subr.mxu0 0.0
      %1294 = vmatpush2.xpose.msra.mxu0 0.0
      %1295 = vmatprep.subr.mxu0 0.0
      %1296 = vmatpush2.xpose.msra.mxu0 0.0
      %1297 = vmatprep.subr.mxu0 0.0
      %1298 = vmatpush2.xpose.msra.mxu0 0.0
      %1299 = vmatprep.subr.mxu0 0.0
      %1300 = vmatpush2.xpose.msra.mxu0 0.0
      %1301 = vmatprep.subr.mxu0 0.0
      %1302 = vmatpush2.xpose.msra.mxu0 0.0
      %1303 = vmatprep.subr.mxu0 0.0
      %1304 = vmatpush2.xpose.msra.mxu0 0.0
      %1305 = vmatprep.subr.mxu0 0.0
      %1306 = vmatpush2.xpose.msra.mxu0 0.0
      %1307 = vmatprep.subr.mxu0 0.0
      %1308 = vmatpush2.xpose.msra.mxu0 0.0
      %1309 = vmatprep.subr.mxu0 0.0
      %1310 = vmatpush2.xpose.msra.mxu0 0.0
      %1311 = vmatprep.subr.mxu0 0.0
      %1312 = vmatpush2.xpose.msra.mxu0 0.0
      %1313 = vmatprep.subr.mxu0 0.0
      %1314 = vmatpush2.xpose.msra.mxu0 0.0
      %1315 = vmatprep.subr.mxu0 0.0
      %1316 = vmatpush2.xpose.msra.mxu0 0.0
      %1317 = vmatprep.subr.mxu0 0.0
      %1318 = vmatpush2.xpose.msra.mxu0 0.0
      %1319 = vmatprep.subr.mxu0 0.0
      %1320 = vmatpush2.xpose.msra.mxu0 0.0
      %1321 = vmatprep.subr.mxu0 0.0
      %1322 = vmatpush2.xpose.msra.mxu0 0.0
      %1323 = vmatprep.subr.mxu0 0.0
      %1324 = vmatpush2.xpose.msra.mxu0 0.0
      %1325 = vmatprep.mubr.f32.mxu0 0.0
      %1326 = vmatmul.mubr.f32.gmra.mxu0 %v1256
      %v1327 = vpop.f32.mrf.mxu0
      %v1328 = vadd.f32 0.0, %v1327
      %v1329 = vpop.f32.mrf.mxu0
      %1330 = vdwg.mxu0
      %v1331 = vsel %vm505, %v503, 0
      %v1334 = vsel %vm505, %v322, 0
      %1336 = vmatprep.subr.mxu0 0.0
      %1337 = vmatpush1.xpose.msra.mxu0 0.0
      %1338 = vmatprep.subr.mxu0 0.0
      %1339 = vmatpush1.xpose.msra.mxu0 0.0
      %1340 = vmatprep.subr.mxu0 0.0
      %1341 = vmatpush1.xpose.msra.mxu0 0.0
      %1342 = vmatprep.subr.mxu0 0.0
      %1343 = vmatpush1.xpose.msra.mxu0 0.0
      %1344 = vmatprep.subr.mxu0 0.0
      %1345 = vmatpush1.xpose.msra.mxu0 0.0
      %1346 = vmatprep.subr.mxu0 0.0
      %1347 = vmatpush1.xpose.msra.mxu0 0.0
      %1348 = vmatprep.subr.mxu0 0.0
      %1349 = vmatpush1.xpose.msra.mxu0 0.0
      %1350 = vmatprep.subr.mxu0 0.0
      %1351 = vmatpush1.xpose.msra.mxu0 0.0
      %1352 = vmatprep.subr.mxu0 0.0
      %1353 = vmatpush1.xpose.msra.mxu0 0.0
      %1354 = vmatprep.subr.mxu0 0.0
      %1355 = vmatpush1.xpose.msra.mxu0 0.0
      %1356 = vmatprep.subr.mxu0 0.0
      %1357 = vmatpush1.xpose.msra.mxu0 0.0
      %1358 = vmatprep.subr.mxu0 0.0
      %1359 = vmatpush1.xpose.msra.mxu0 0.0
      %1360 = vmatprep.subr.mxu0 0.0
      %1361 = vmatpush1.xpose.msra.mxu0 0.0
      %1362 = vmatprep.subr.mxu0 0.0
      %1363 = vmatpush1.xpose.msra.mxu0 0.0
      %1364 = vmatprep.subr.mxu0 0.0
      %1365 = vmatpush1.xpose.msra.mxu0 0.0
      %1366 = vmatprep.subr.mxu0 0.0
      %1367 = vmatpush1.xpose.msra.mxu0 %v1334
      %1368 = vmatprep.subr.mxu0 0.0
      %1369 = vmatpush2.xpose.msra.mxu0 0.0
      %1370 = vmatprep.subr.mxu0 0.0
      %1371 = vmatpush2.xpose.msra.mxu0 0.0
      %1372 = vmatprep.subr.mxu0 0.0
      %1373 = vmatpush2.xpose.msra.mxu0 0.0
      %1374 = vmatprep.subr.mxu0 0.0
      %1375 = vmatpush2.xpose.msra.mxu0 0.0
      %1376 = vmatprep.subr.mxu0 0.0
      %1377 = vmatpush2.xpose.msra.mxu0 0.0
      %1378 = vmatprep.subr.mxu0 0.0
      %1379 = vmatpush2.xpose.msra.mxu0 0.0
      %1380 = vmatprep.subr.mxu0 0.0
      %1381 = vmatpush2.xpose.msra.mxu0 0.0
      %1382 = vmatprep.subr.mxu0 0.0
      %1383 = vmatpush2.xpose.msra.mxu0 0.0
      %1384 = vmatprep.subr.mxu0 0.0
      %1385 = vmatpush2.xpose.msra.mxu0 0.0
      %1386 = vmatprep.subr.mxu0 0.0
      %1387 = vmatpush2.xpose.msra.mxu0 0.0
      %1388 = vmatprep.subr.mxu0 0.0
      %1389 = vmatpush2.xpose.msra.mxu0 0.0
      %1390 = vmatprep.subr.mxu0 0.0
      %1391 = vmatpush2.xpose.msra.mxu0 0.0
      %1392 = vmatprep.subr.mxu0 0.0
      %1393 = vmatpush2.xpose.msra.mxu0 0.0
      %1394 = vmatprep.subr.mxu0 0.0
      %1395 = vmatpush2.xpose.msra.mxu0 0.0
      %1396 = vmatprep.subr.mxu0 0.0
      %1397 = vmatpush2.xpose.msra.mxu0 0.0
      %1398 = vmatprep.subr.mxu0 0.0
      %1399 = vmatpush2.xpose.msra.mxu0 0.0
      %1400 = vmatprep.mubr.f32.mxu0 0.0
      %1401 = vmatmul.mubr.f32.gmra.mxu0 %v1331
      %v1402 = vpop.f32.mrf.mxu0
      %v1403 = vadd.f32 0.0, %v1402
      %v1404 = vpop.f32.mrf.mxu0
      %1405 = vdwg.mxu0
      %v1406 = vsel %vm505, %v486, 0
      %v1409 = vsel %vm505, %v323, 0
      %1411 = vmatprep.subr.mxu0 0.0
      %1412 = vmatpush1.xpose.msra.mxu0 0.0
      %1413 = vmatprep.subr.mxu0 0.0
      %1414 = vmatpush1.xpose.msra.mxu0 0.0
      %1415 = vmatprep.subr.mxu0 0.0
      %1416 = vmatpush1.xpose.msra.mxu0 0.0
      %1417 = vmatprep.subr.mxu0 0.0
      %1418 = vmatpush1.xpose.msra.mxu0 0.0
      %1419 = vmatprep.subr.mxu0 0.0
      %1420 = vmatpush1.xpose.msra.mxu0 0.0
      %1421 = vmatprep.subr.mxu0 0.0
      %1422 = vmatpush1.xpose.msra.mxu0 0.0
      %1423 = vmatprep.subr.mxu0 0.0
      %1424 = vmatpush1.xpose.msra.mxu0 0.0
      %1425 = vmatprep.subr.mxu0 0.0
      %1426 = vmatpush1.xpose.msra.mxu0 0.0
      %1427 = vmatprep.subr.mxu0 0.0
      %1428 = vmatpush1.xpose.msra.mxu0 0.0
      %1429 = vmatprep.subr.mxu0 0.0
      %1430 = vmatpush1.xpose.msra.mxu0 0.0
      %1431 = vmatprep.subr.mxu0 0.0
      %1432 = vmatpush1.xpose.msra.mxu0 0.0
      %1433 = vmatprep.subr.mxu0 0.0
      %1434 = vmatpush1.xpose.msra.mxu0 0.0
      %1435 = vmatprep.subr.mxu0 0.0
      %1436 = vmatpush1.xpose.msra.mxu0 0.0
      %1437 = vmatprep.subr.mxu0 0.0
      %1438 = vmatpush1.xpose.msra.mxu0 0.0
      %1439 = vmatprep.subr.mxu0 0.0
      %1440 = vmatpush1.xpose.msra.mxu0 0.0
      %1441 = vmatprep.subr.mxu0 0.0
      %1442 = vmatpush1.xpose.msra.mxu0 %v1409
      %1443 = vmatprep.subr.mxu0 0.0
      %1444 = vmatpush2.xpose.msra.mxu0 0.0
      %1445 = vmatprep.subr.mxu0 0.0
      %1446 = vmatpush2.xpose.msra.mxu0 0.0
      %1447 = vmatprep.subr.mxu0 0.0
      %1448 = vmatpush2.xpose.msra.mxu0 0.0
      %1449 = vmatprep.subr.mxu0 0.0
      %1450 = vmatpush2.xpose.msra.mxu0 0.0
      %1451 = vmatprep.subr.mxu0 0.0
      %1452 = vmatpush2.xpose.msra.mxu0 0.0
      %1453 = vmatprep.subr.mxu0 0.0
      %1454 = vmatpush2.xpose.msra.mxu0 0.0
      %1455 = vmatprep.subr.mxu0 0.0
      %1456 = vmatpush2.xpose.msra.mxu0 0.0
      %1457 = vmatprep.subr.mxu0 0.0
      %1458 = vmatpush2.xpose.msra.mxu0 0.0
      %1459 = vmatprep.subr.mxu0 0.0
      %1460 = vmatpush2.xpose.msra.mxu0 0.0
      %1461 = vmatprep.subr.mxu0 0.0
      %1462 = vmatpush2.xpose.msra.mxu0 0.0
      %1463 = vmatprep.subr.mxu0 0.0
      %1464 = vmatpush2.xpose.msra.mxu0 0.0
      %1465 = vmatprep.subr.mxu0 0.0
      %1466 = vmatpush2.xpose.msra.mxu0 0.0
      %1467 = vmatprep.subr.mxu0 0.0
      %1468 = vmatpush2.xpose.msra.mxu0 0.0
      %1469 = vmatprep.subr.mxu0 0.0
      %1470 = vmatpush2.xpose.msra.mxu0 0.0
      %1471 = vmatprep.subr.mxu0 0.0
      %1472 = vmatpush2.xpose.msra.mxu0 0.0
      %1473 = vmatprep.subr.mxu0 0.0
      %1474 = vmatpush2.xpose.msra.mxu0 0.0
      %1475 = vmatprep.mubr.f32.mxu0 0.0
      %1476 = vmatmul.mubr.f32.gmra.mxu0 %v1406
      %v1477 = vpop.f32.mrf.mxu0
      %v1478 = vadd.f32 0.0, %v1477
      %v1479 = vpop.f32.mrf.mxu0
      %1480 = vdwg.mxu0
      %v1481 = vsel %vm505, %v500, 0
      %v1484 = vsel %vm505, %v324, 0
      %1486 = vmatprep.subr.mxu0 0.0
      %1487 = vmatpush1.xpose.msra.mxu0 0.0
      %1488 = vmatprep.subr.mxu0 0.0
      %1489 = vmatpush1.xpose.msra.mxu0 0.0
      %1490 = vmatprep.subr.mxu0 0.0
      %1491 = vmatpush1.xpose.msra.mxu0 0.0
      %1492 = vmatprep.subr.mxu0 0.0
      %1493 = vmatpush1.xpose.msra.mxu0 0.0
      %1494 = vmatprep.subr.mxu0 0.0
      %1495 = vmatpush1.xpose.msra.mxu0 0.0
      %1496 = vmatprep.subr.mxu0 0.0
      %1497 = vmatpush1.xpose.msra.mxu0 0.0
      %1498 = vmatprep.subr.mxu0 0.0
      %1499 = vmatpush1.xpose.msra.mxu0 0.0
      %1500 = vmatprep.subr.mxu0 0.0
      %1501 = vmatpush1.xpose.msra.mxu0 0.0
      %1502 = vmatprep.subr.mxu0 0.0
      %1503 = vmatpush1.xpose.msra.mxu0 0.0
      %1504 = vmatprep.subr.mxu0 0.0
      %1505 = vmatpush1.xpose.msra.mxu0 0.0
      %1506 = vmatprep.subr.mxu0 0.0
      %1507 = vmatpush1.xpose.msra.mxu0 0.0
      %1508 = vmatprep.subr.mxu0 0.0
      %1509 = vmatpush1.xpose.msra.mxu0 0.0
      %1510 = vmatprep.subr.mxu0 0.0
      %1511 = vmatpush1.xpose.msra.mxu0 0.0
      %1512 = vmatprep.subr.mxu0 0.0
      %1513 = vmatpush1.xpose.msra.mxu0 0.0
      %1514 = vmatprep.subr.mxu0 0.0
      %1515 = vmatpush1.xpose.msra.mxu0 0.0
      %1516 = vmatprep.subr.mxu0 0.0
      %1517 = vmatpush1.xpose.msra.mxu0 %v1484
      %1518 = vmatprep.subr.mxu0 0.0
      %1519 = vmatpush2.xpose.msra.mxu0 0.0
      %1520 = vmatprep.subr.mxu0 0.0
      %1521 = vmatpush2.xpose.msra.mxu0 0.0
      %1522 = vmatprep.subr.mxu0 0.0
      %1523 = vmatpush2.xpose.msra.mxu0 0.0
      %1524 = vmatprep.subr.mxu0 0.0
      %1525 = vmatpush2.xpose.msra.mxu0 0.0
      %1526 = vmatprep.subr.mxu0 0.0
      %1527 = vmatpush2.xpose.msra.mxu0 0.0
      %1528 = vmatprep.subr.mxu0 0.0
      %1529 = vmatpush2.xpose.msra.mxu0 0.0
      %1530 = vmatprep.subr.mxu0 0.0
      %1531 = vmatpush2.xpose.msra.mxu0 0.0
      %1532 = vmatprep.subr.mxu0 0.0
      %1533 = vmatpush2.xpose.msra.mxu0 0.0
      %1534 = vmatprep.subr.mxu0 0.0
      %1535 = vmatpush2.xpose.msra.mxu0 0.0
      %1536 = vmatprep.subr.mxu0 0.0
      %1537 = vmatpush2.xpose.msra.mxu0 0.0
      %1538 = vmatprep.subr.mxu0 0.0
      %1539 = vmatpush2.xpose.msra.mxu0 0.0
      %1540 = vmatprep.subr.mxu0 0.0
      %1541 = vmatpush2.xpose.msra.mxu0 0.0
      %1542 = vmatprep.subr.mxu0 0.0
      %1543 = vmatpush2.xpose.msra.mxu0 0.0
      %1544 = vmatprep.subr.mxu0 0.0
      %1545 = vmatpush2.xpose.msra.mxu0 0.0
      %1546 = vmatprep.subr.mxu0 0.0
      %1547 = vmatpush2.xpose.msra.mxu0 0.0
      %1548 = vmatprep.subr.mxu0 0.0
      %1549 = vmatpush2.xpose.msra.mxu0 0.0
      %1550 = vmatprep.mubr.f32.mxu0 0.0
      %1551 = vmatmul.mubr.f32.gmra.mxu0 %v1481
      %v1552 = vpop.f32.mrf.mxu0
      %v1553 = vadd.f32 0.0, %v1552
      %v1554 = vpop.f32.mrf.mxu0
      %1555 = vdwg.mxu0
      %v1556 = vsel %vm505, %v502, 0
      %v1559 = vsel %vm505, %v325, 0
      %1561 = vmatprep.subr.mxu0 0.0
      %1562 = vmatpush1.xpose.msra.mxu0 0.0
      %1563 = vmatprep.subr.mxu0 0.0
      %1564 = vmatpush1.xpose.msra.mxu0 0.0
      %1565 = vmatprep.subr.mxu0 0.0
      %1566 = vmatpush1.xpose.msra.mxu0 0.0
      %1567 = vmatprep.subr.mxu0 0.0
      %1568 = vmatpush1.xpose.msra.mxu0 0.0
      %1569 = vmatprep.subr.mxu0 0.0
      %1570 = vmatpush1.xpose.msra.mxu0 0.0
      %1571 = vmatprep.subr.mxu0 0.0
      %1572 = vmatpush1.xpose.msra.mxu0 0.0
      %1573 = vmatprep.subr.mxu0 0.0
      %1574 = vmatpush1.xpose.msra.mxu0 0.0
      %1575 = vmatprep.subr.mxu0 0.0
      %1576 = vmatpush1.xpose.msra.mxu0 0.0
      %1577 = vmatprep.subr.mxu0 0.0
      %1578 = vmatpush1.xpose.msra.mxu0 0.0
      %1579 = vmatprep.subr.mxu0 0.0
      %1580 = vmatpush1.xpose.msra.mxu0 0.0
      %1581 = vmatprep.subr.mxu0 0.0
      %1582 = vmatpush1.xpose.msra.mxu0 0.0
      %1583 = vmatprep.subr.mxu0 0.0
      %1584 = vmatpush1.xpose.msra.mxu0 0.0
      %1585 = vmatprep.subr.mxu0 0.0
      %1586 = vmatpush1.xpose.msra.mxu0 0.0
      %1587 = vmatprep.subr.mxu0 0.0
      %1588 = vmatpush1.xpose.msra.mxu0 0.0
      %1589 = vmatprep.subr.mxu0 0.0
      %1590 = vmatpush1.xpose.msra.mxu0 0.0
      %1591 = vmatprep.subr.mxu0 0.0
      %1592 = vmatpush1.xpose.msra.mxu0 %v1559
      %1593 = vmatprep.subr.mxu0 0.0
      %1594 = vmatpush2.xpose.msra.mxu0 0.0
      %1595 = vmatprep.subr.mxu0 0.0
      %1596 = vmatpush2.xpose.msra.mxu0 0.0
      %1597 = vmatprep.subr.mxu0 0.0
      %1598 = vmatpush2.xpose.msra.mxu0 0.0
      %1599 = vmatprep.subr.mxu0 0.0
      %1600 = vmatpush2.xpose.msra.mxu0 0.0
      %1601 = vmatprep.subr.mxu0 0.0
      %1602 = vmatpush2.xpose.msra.mxu0 0.0
      %1603 = vmatprep.subr.mxu0 0.0
      %1604 = vmatpush2.xpose.msra.mxu0 0.0
      %1605 = vmatprep.subr.mxu0 0.0
      %1606 = vmatpush2.xpose.msra.mxu0 0.0
      %1607 = vmatprep.subr.mxu0 0.0
      %1608 = vmatpush2.xpose.msra.mxu0 0.0
      %1609 = vmatprep.subr.mxu0 0.0
      %1610 = vmatpush2.xpose.msra.mxu0 0.0
      %1611 = vmatprep.subr.mxu0 0.0
      %1612 = vmatpush2.xpose.msra.mxu0 0.0
      %1613 = vmatprep.subr.mxu0 0.0
      %1614 = vmatpush2.xpose.msra.mxu0 0.0
      %1615 = vmatprep.subr.mxu0 0.0
      %1616 = vmatpush2.xpose.msra.mxu0 0.0
      %1617 = vmatprep.subr.mxu0 0.0
      %1618 = vmatpush2.xpose.msra.mxu0 0.0
      %1619 = vmatprep.subr.mxu0 0.0
      %1620 = vmatpush2.xpose.msra.mxu0 0.0
      %1621 = vmatprep.subr.mxu0 0.0
      %1622 = vmatpush2.xpose.msra.mxu0 0.0
      %1623 = vmatprep.subr.mxu0 0.0
      %1624 = vmatpush2.xpose.msra.mxu0 0.0
      %1625 = vmatprep.mubr.f32.mxu0 0.0
      %1626 = vmatmul.mubr.f32.gmra.mxu0 %v1556
      %v1627 = vpop.f32.mrf.mxu0
      %v1628 = vadd.f32 0.0, %v1627
      %v1629 = vpop.f32.mrf.mxu0
      %1630 = vdwg.mxu0
      %v1631 = vsel %vm505, %v504, 0
      %v1634 = vsel %vm505, %v326, 0
      %1636 = vmatprep.subr.mxu0 0.0
      %1637 = vmatpush1.xpose.msra.mxu0 0.0
      %1638 = vmatprep.subr.mxu0 0.0
      %1639 = vmatpush1.xpose.msra.mxu0 0.0
      %1640 = vmatprep.subr.mxu0 0.0
      %1641 = vmatpush1.xpose.msra.mxu0 0.0
      %1642 = vmatprep.subr.mxu0 0.0
      %1643 = vmatpush1.xpose.msra.mxu0 0.0
      %1644 = vmatprep.subr.mxu0 0.0
      %1645 = vmatpush1.xpose.msra.mxu0 0.0
      %1646 = vmatprep.subr.mxu0 0.0
      %1647 = vmatpush1.xpose.msra.mxu0 0.0
      %1648 = vmatprep.subr.mxu0 0.0
      %1649 = vmatpush1.xpose.msra.mxu0 0.0
      %1650 = vmatprep.subr.mxu0 0.0
      %1651 = vmatpush1.xpose.msra.mxu0 0.0
      %1652 = vmatprep.subr.mxu0 0.0
      %1653 = vmatpush1.xpose.msra.mxu0 0.0
      %1654 = vmatprep.subr.mxu0 0.0
      %1655 = vmatpush1.xpose.msra.mxu0 0.0
      %1656 = vmatprep.subr.mxu0 0.0
      %1657 = vmatpush1.xpose.msra.mxu0 0.0
      %1658 = vmatprep.subr.mxu0 0.0
      %1659 = vmatpush1.xpose.msra.mxu0 0.0
      %1660 = vmatprep.subr.mxu0 0.0
      %1661 = vmatpush1.xpose.msra.mxu0 0.0
      %1662 = vmatprep.subr.mxu0 0.0
      %1663 = vmatpush1.xpose.msra.mxu0 0.0
      %1664 = vmatprep.subr.mxu0 0.0
      %1665 = vmatpush1.xpose.msra.mxu0 0.0
      %1666 = vmatprep.subr.mxu0 0.0
      %1667 = vmatpush1.xpose.msra.mxu0 %v1634
      %1668 = vmatprep.subr.mxu0 0.0
      %1669 = vmatpush2.xpose.msra.mxu0 0.0
      %1670 = vmatprep.subr.mxu0 0.0
      %1671 = vmatpush2.xpose.msra.mxu0 0.0
      %1672 = vmatprep.subr.mxu0 0.0
      %1673 = vmatpush2.xpose.msra.mxu0 0.0
      %1674 = vmatprep.subr.mxu0 0.0
      %1675 = vmatpush2.xpose.msra.mxu0 0.0
      %1676 = vmatprep.subr.mxu0 0.0
      %1677 = vmatpush2.xpose.msra.mxu0 0.0
      %1678 = vmatprep.subr.mxu0 0.0
      %1679 = vmatpush2.xpose.msra.mxu0 0.0
      %1680 = vmatprep.subr.mxu0 0.0
      %1681 = vmatpush2.xpose.msra.mxu0 0.0
      %1682 = vmatprep.subr.mxu0 0.0
      %1683 = vmatpush2.xpose.msra.mxu0 0.0
      %1684 = vmatprep.subr.mxu0 0.0
      %1685 = vmatpush2.xpose.msra.mxu0 0.0
      %1686 = vmatprep.subr.mxu0 0.0
      %1687 = vmatpush2.xpose.msra.mxu0 0.0
      %1688 = vmatprep.subr.mxu0 0.0
      %1689 = vmatpush2.xpose.msra.mxu0 0.0
      %1690 = vmatprep.subr.mxu0 0.0
      %1691 = vmatpush2.xpose.msra.mxu0 0.0
      %1692 = vmatprep.subr.mxu0 0.0
      %1693 = vmatpush2.xpose.msra.mxu0 0.0
      %1694 = vmatprep.subr.mxu0 0.0
      %1695 = vmatpush2.xpose.msra.mxu0 0.0
      %1696 = vmatprep.subr.mxu0 0.0
      %1697 = vmatpush2.xpose.msra.mxu0 0.0
      %1698 = vmatprep.subr.mxu0 0.0
      %1699 = vmatpush2.xpose.msra.mxu0 0.0
      %1700 = vmatprep.mubr.f32.mxu0 0.0
      %1701 = vmatmul.mubr.f32.gmra.mxu0 %v1631
      %v1702 = vpop.f32.mrf.mxu0
      %v1703 = vadd.f32 0.0, %v1702
      %v1704 = vpop.f32.mrf.mxu0
      %1705 = vdwg.mxu0
      %1707 = vset.pattern.permute.xlu0 0
      %1708 = vperm.xlu0 %1707, %v403
      %v1709 = vpop.permute.xlu0 %1708
      %1712 = vset.pattern.permute.xlu0 0
      %1713 = vperm.xlu0 %1712, %v404
      %v1714 = vpop.permute.xlu0 %1713
      %v1732 = vrot.slane %v653, 7
      %vm1733 = vcmask 1041409
      %v1734 = vsel %vm1733, %v1732, %v578
      %v1735 = vrot.slane %v728, 6
      %vm1736 = vcmask 1042434
      %v1737 = vsel %vm1736, %v1735, %v1734
      %v1738 = vrot.slane %v803, 5
      %vm1739 = vcmask 1043459
      %v1740 = vsel %vm1739, %v1738, %v1737
      %v1741 = vrot.slane %v878, 4
      %vm1742 = vcmask 1044484
      %v1743 = vsel %vm1742, %v1741, %v1740
      %v1744 = vrot.slane %v953, 3
      %vm1745 = vcmask 1045509
      %v1746 = vsel %vm1745, %v1744, %v1743
      %v1747 = vrot.slane %v1028, 2
      %vm1748 = vcmask 1046534
      %v1749 = vsel %vm1748, %v1747, %v1746
      %v1750 = vrot.slane %v1103, 1
      %vm1751 = vcmask 1047559
      %v1752 = vsel %vm1751, %v1750, %v1749
      %v1753 = vrot.slane %v1253, 7
      %v1754 = vsel %vm1733, %v1753, %v1178
      %v1755 = vrot.slane %v1328, 6
      %v1756 = vsel %vm1736, %v1755, %v1754
      %v1757 = vrot.slane %v1403, 5
      %v1758 = vsel %vm1739, %v1757, %v1756
      %v1759 = vrot.slane %v1478, 4
      %v1760 = vsel %vm1742, %v1759, %v1758
      %v1761 = vrot.slane %v1553, 3
      %v1762 = vsel %vm1745, %v1761, %v1760
      %v1763 = vrot.slane %v1628, 2
      %v1764 = vsel %vm1748, %v1763, %v1762
      %v1765 = vrot.slane %v1703, 1
      %v1766 = vsel %vm1751, %v1765, %v1764
      %v1769 = vmul.f32 %v1709, %v1752
      %v1770 = vmul.f32 %v1714, %v1766
      %1773 = vrot.lane.b32.xlu0 %v327, 127
      %v1774 = vpop.permute.xlu0 %1773
      %1775 = vrot.lane.b32.xlu0 %v328, 127
      %v1776 = vpop.permute.xlu0 %1775
      %v1779 = vadd.f32 %v1769, %v1774
      %v1780 = vadd.f32 %v1770, %v1776
      %1782 = vset.pattern.permute.xlu0 0
      %1783 = vperm.xlu0 %1782, %v1779
      %v1784 = vpop.permute.xlu0 %1783
      %1787 = vset.pattern.permute.xlu0 0
      %1788 = vperm.xlu0 %1787, %v1780
      %v1789 = vpop.permute.xlu0 %1788
      %v1791 = vsub.f32 %v1784, %v1779
      %v1792 = vsub.f32 %v1789, %v1780
      %v1793 = vsub.f32 1.0, %v1791
      %v1794 = vsub.f32 1.0, %v1792
      %v1795 = vmul.f32 %v1793, %v1793
      %v1796 = vmul.f32 %v1794, %v1794
      %1799 = vrot.lane.b32.xlu0 %v1795, 127
      %v1800 = vpop.permute.xlu0 %1799
      %1801 = vrot.lane.b32.xlu0 %v1796, 127
      %v1802 = vpop.permute.xlu0 %1801
      %vm1805 = vcmask 31744
      %v1806 = vsel %vm1805, %v1800, 0.0
      %v1807 = vsel %vm1805, %v1802, 0.0
      %v1808 = vadd.f32 %v1806, %v1807
      %1809 = vadd.xlane.f32.xlu0 %v1808
      %v1810 = vpop.xlane.xlu0 %1809
      %v1811 = vrot.slane %v1810, 4
      %v1812 = vadd.f32 %v1810, %v1811
      %v1813 = vrot.slane %v1812, 2
      %v1814 = vadd.f32 %v1812, %v1813
      %v1815 = vrot.slane %v1814, 1
      %v1816 = vadd.f32 %v1814, %v1815
      %s1817 = vtos %v1816
      %v1818 = vmul.f32 %v397, %v397
      %v1819 = vmul.f32 %v400, %v400
      %v1820 = vsel %vm505, %v1818, 0.0
      %v1821 = vsel %vm505, %v1819, 0.0
      %v1822 = vadd.f32 %v1820, %v1821
      %1823 = vadd.xlane.f32.xlu0 %v1822
      %v1824 = vpop.xlane.xlu0 %1823
      %v1825 = vrot.slane %v1824, 4
      %v1826 = vadd.f32 %v1824, %v1825
      %v1827 = vrot.slane %v1826, 2
      %v1828 = vadd.f32 %v1826, %v1827
      %v1829 = vrot.slane %v1828, 1
      %v1830 = vadd.f32 %v1828, %v1829
      %s1831 = vtos %v1830
      %s1832 = smul.f32 %s1831, 0.01
      %v1833 = vmul.f32 %v311, %v311
      %v1834 = vmul.f32 %v312, %v312
      %v1835 = vmul.f32 %v313, %v313
      %v1836 = vmul.f32 %v314, %v314
      %v1837 = vmul.f32 %v315, %v315
      %v1838 = vmul.f32 %v316, %v316
      %v1839 = vmul.f32 %v317, %v317
      %v1840 = vmul.f32 %v318, %v318
      %v1841 = vmul.f32 %v319, %v319
      %v1842 = vmul.f32 %v320, %v320
      %v1843 = vmul.f32 %v321, %v321
      %v1844 = vmul.f32 %v322, %v322
      %v1845 = vmul.f32 %v323, %v323
      %v1846 = vmul.f32 %v324, %v324
      %v1847 = vmul.f32 %v325, %v325
      %v1848 = vmul.f32 %v326, %v326
      %vm1849 = vcmask 258048
      %v1850 = vsel %vm1849, %v1833, 0.0
      %v1851 = vsel %vm1849, %v1834, 0.0
      %v1852 = vadd.f32 %v1850, %v1851
      %v1853 = vsel %vm1849, %v1835, 0.0
      %v1854 = vadd.f32 %v1852, %v1853
      %v1855 = vsel %vm1849, %v1836, 0.0
      %v1856 = vadd.f32 %v1854, %v1855
      %v1857 = vsel %vm1849, %v1837, 0.0
      %v1858 = vadd.f32 %v1856, %v1857
      %v1859 = vsel %vm1849, %v1838, 0.0
      %v1860 = vadd.f32 %v1858, %v1859
      %v1861 = vsel %vm1849, %v1839, 0.0
      %v1862 = vadd.f32 %v1860, %v1861
      %v1863 = vsel %vm1849, %v1840, 0.0
      %v1864 = vadd.f32 %v1862, %v1863
      %v1865 = vsel %vm1849, %v1841, 0.0
      %v1866 = vadd.f32 %v1864, %v1865
      %v1867 = vsel %vm1849, %v1842, 0.0
      %v1868 = vadd.f32 %v1866, %v1867
      %v1869 = vsel %vm1849, %v1843, 0.0
      %v1870 = vadd.f32 %v1868, %v1869
      %v1871 = vsel %vm1849, %v1844, 0.0
      %v1872 = vadd.f32 %v1870, %v1871
      %v1873 = vsel %vm1849, %v1845, 0.0
      %v1874 = vadd.f32 %v1872, %v1873
      %v1875 = vsel %vm1849, %v1846, 0.0
      %v1876 = vadd.f32 %v1874, %v1875
      %v1877 = vsel %vm1849, %v1847, 0.0
      %v1878 = vadd.f32 %v1876, %v1877
      %v1879 = vsel %vm1849, %v1848, 0.0
      %v1880 = vadd.f32 %v1878, %v1879
      %1881 = vadd.xlane.f32.xlu0 %v1880
      %v1882 = vpop.xlane.xlu0 %1881
      %v1883 = vrot.slane %v1882, 4
      %v1884 = vadd.f32 %v1882, %v1883
      %v1885 = vrot.slane %v1884, 2
      %v1886 = vadd.f32 %v1884, %v1885
      %v1887 = vrot.slane %v1886, 1
      %v1888 = vadd.f32 %v1886, %v1887
      %s1889 = vtos %v1888
      %s1890 = smul.f32 %s1889, 0.01
      %s1891 = sadd.f32 %s1832, %s1890
      %v1892 = vmul.f32 %v327, %v327
      %v1893 = vmul.f32 %v328, %v328
      %1896 = vrot.lane.b32.xlu0 %v1892, 127
      %v1897 = vpop.permute.xlu0 %1896
      %1898 = vrot.lane.b32.xlu0 %v1893, 127
      %v1899 = vpop.permute.xlu0 %1898
      %vm1902 = vcmask 39936
      %v1903 = vsel %vm1902, %v1897, 0.0
      %v1904 = vsel %vm1902, %v1899, 0.0
      %v1905 = vadd.f32 %v1903, %v1904
      %1906 = vadd.xlane.f32.xlu0 %v1905
      %v1907 = vpop.xlane.xlu0 %1906
      %v1908 = vrot.slane %v1907, 4
      %v1909 = vadd.f32 %v1907, %v1908
      %v1910 = vrot.slane %v1909, 2
      %v1911 = vadd.f32 %v1909, %v1910
      %v1912 = vrot.slane %v1911, 1
      %v1913 = vadd.f32 %v1911, %v1912
      %s1914 = vtos %v1913
      %s1915 = smul.f32 %s1914, 0.01
      %s1916 = sadd.f32 %s1891, %s1915
      %v1917 = vld [vmem:[%s293] sm:$0x1]
      %s1918 = sadd.f32 %s1817, %s1916
      %v1919 = vstv %s1918
      %v1920 = vadd.f32 %v1917, %v1919
      %vm1921 = vcmask 0
      %1922 = vst.msk [vmem:[%s293] sm:$0x1] %vm1921, %v1920
      %p1923 = scmp.lt.s32.totalorder %s19, 1
      %s1924 = scalar_select %p1923, %s19, 1
      %s1925 = scalar_lea.vmem %s4, %s1924
      // Predicated region
      $region41: #{tpu_custom_call.1} parent=35 // pred_check
        %p1926 = pneg %p156
      $region42: #{tpu_custom_call.1} parent=35 // pred_check_branch
        %1928 = sbr.rel (%p1926) target = $region44
      $region43: #{tpu_custom_call.1} parent=35 // pred_region
        _
      $region44: #{tpu_custom_call.1} parent=35 // pred_fallthru
        _
    $region36: #{tpu_custom_call.1} parent=5 // pred_fallthru
      _
    %p1929 = scmp.le.s32.totalorder 2, %s10
    // Predicated region
    $region45: #{tpu_custom_call.1} parent=5 // pred_check
      %p1930 = pneg %p1929
    $region46: #{tpu_custom_call.1} parent=5 // pred_check_branch
      %1932 = sbr.rel (%p1930) target = $region48
    $region47: #{tpu_custom_call.1} parent=5 // pred_region
      %s1933 = ssub.s32 %s10, 2
      // Predicated region
      $region49: #{tpu_custom_call.1} parent=47 // pred_check
        %p1934 = pneg %p162
      $region50: #{tpu_custom_call.1} parent=47 // pred_check_branch
        %1936 = sbr.rel (%p1934) target = $region52
      $region51: #{tpu_custom_call.1} parent=47 // pred_region
        %p1937 = scmp.lt.s32.totalorder %s21, 1
        %s1938 = scalar_select %p1937, %s21, 1
        %s1939 = scalar_lea.vmem %s4, %s1938
      $region52: #{tpu_custom_call.1} parent=47 // pred_fallthru
        _
    $region48: #{tpu_custom_call.1} parent=5 // pred_fallthru
      _
  $region6: #{tpu_custom_call.1} parent=0 // loop_footer
    %s14 = sadd.s32 1, %s10
  $region7: #{tpu_custom_call.1} parent=0 // loop_footer_branch
    %9 = sbr.rel target = $region3
  $region8: #{tpu_custom_call.1} parent=0 // loop_exit
    _

</llo_original>
